<compile_context>
chip_gen: v5e
topology: v5e:2x2
jax: 0.10.0
libtpu: 0.0.40
codegen_flags: <defaults>
</compile_context>

<pallas_src>
import jax
import jax.numpy as jnp
from jax import lax
from jax.experimental import pallas as pl
from jax.experimental.pallas import tpu as pltpu


def _round_up(x, m):
    return ((x + m - 1) // m) * m


def _graph_conv_kernel(so_col_ref, so_row_ref, obj_ref, pred_ref,
                       w1s_ref, w1p_ref, w1o_ref, b1_ref,
                       w2s_ref, w2p_ref, w2o_ref, b2s_ref, b2p_ref, b2o_ref,
                       w3_ref, b3_ref, w4_ref, b4_ref,
                       new_obj_ref, new_p_ref):
    f32 = jnp.float32
    mxu_dt = w1s_ref.dtype                 # bf16 (MXU-native) by default
    T2 = so_col_ref.shape[0]               # 2 * T_pad
    Tp = T2 // 2
    Op = obj_ref.shape[0]

    # One-hot edge->object selection, built directly in BOTH orientations with
    # VPU compares (no XLU transpose). Subject and object halves are stacked so
    # the gather and the scatter each take a single MXU push.
    so_col = so_col_ref[...]                                             # (2T, 1)
    so_row = so_row_ref[...]                                             # (1, 2T)
    gather_oh = (lax.broadcasted_iota(jnp.int32, (T2, Op), 1) == so_col)
    gather_oh = gather_oh.astype(f32).astype(mxu_dt)                     # (2T, O)
    scatter_f32 = (lax.broadcasted_iota(jnp.int32, (Op, T2), 0) == so_row).astype(f32)
    scatter_oh = scatter_f32.astype(mxu_dt)                              # (O, 2T)

    # Fused gather: rows [0:T) = obj_vecs[s_idx], rows [T:2T) = obj_vecs[o_idx].
    cur_so = jnp.dot(gather_oh, obj_ref[...], preferred_element_type=f32)  # (2T, Din)
    cur_s = cur_so[:Tp].astype(mxu_dt)      # sublane-aligned static slice (Tp % 8 == 0)
    cur_o = cur_so[Tp:].astype(mxu_dt)

    # net1 layer 1: split-w1 (no lane concat).
    h1 = (jnp.dot(cur_s, w1s_ref[...], preferred_element_type=f32)
          + jnp.dot(pred_ref[...], w1p_ref[...], preferred_element_type=f32)
          + jnp.dot(cur_o, w1o_ref[...], preferred_element_type=f32)
          + b1_ref[...])
    h1 = jnp.maximum(h1, 0.0).astype(mxu_dt)                             # (T, H)

    # net1 layer 2: split-w2 -> three lane-aligned outputs (no lane slicing).
    new_s = jnp.maximum(jnp.dot(h1, w2s_ref[...], preferred_element_type=f32) + b2s_ref[...], 0.0)
    new_p = jnp.maximum(jnp.dot(h1, w2p_ref[...], preferred_element_type=f32) + b2p_ref[...], 0.0)
    new_o = jnp.maximum(jnp.dot(h1, w2o_ref[...], preferred_element_type=f32) + b2o_ref[...], 0.0)

    # Fused scatter-add pooling (single MXU push) + 'avg' normalization.
    new_so = jnp.concatenate([new_s, new_o], axis=0).astype(mxu_dt)      # (2T, H), sublane-aligned
    pooled = jnp.dot(scatter_oh, new_so, preferred_element_type=f32)     # (O, H)
    deg = jnp.maximum(jnp.sum(scatter_f32, axis=1, keepdims=True), 1.0)  # (O, 1), lane reduce
    pooled = pooled * pl.reciprocal(deg, approx=True)                    # EUP reciprocal

    # net2 (elementwise math in f32; only MXU operands in bf16).
    h3 = jnp.maximum(
        jnp.dot(pooled.astype(mxu_dt), w3_ref[...], preferred_element_type=f32) + b3_ref[...], 0.0)
    new_obj = jnp.maximum(
        jnp.dot(h3.astype(mxu_dt), w4_ref[...], preferred_element_type=f32) + b4_ref[...], 0.0)

    new_obj_ref[...] = new_obj.astype(new_obj_ref.dtype)
    new_p_ref[...] = new_p.astype(new_p_ref.dtype)


def graph_conv_forward(obj_vecs, pred_vecs, edges, params, *,
                       hidden_dim, output_dim, mxu_dtype=jnp.bfloat16):
    """Pallas implementation of GraphConv.forward with pooling='avg'."""
    O, Din = obj_vecs.shape
    T = pred_vecs.shape[0]
    H, Dout = hidden_dim, output_dim
    w1, b1, w2, b2, w3, b3, w4, b4 = params

    LANE, SUB = 128, 8
    Din_p = _round_up(Din, LANE)
    H_p = _round_up(H, LANE)
    Dout_p = _round_up(Dout, LANE)
    O_p = _round_up(O, SUB)
    T_p = _round_up(T, SUB)

    f32 = jnp.float32

    def pad2(x, rows, cols):
        return jnp.pad(x, ((0, rows - x.shape[0]), (0, cols - x.shape[1])))

    # Zero-padding is inert: padded weight rows/cols and bias entries are zero,
    # padded object rows are zero, padded edges use index -1 (all-zero one-hot).
    obj_p = pad2(obj_vecs, O_p, Din_p).astype(mxu_dtype)
    pred_p = pad2(pred_vecs, T_p, Din_p).astype(mxu_dtype)

    # Split w1 row-wise (subject / predicate / object blocks).
    w1_s, w1_pr, w1_o = w1[:Din], w1[Din:2 * Din], w1[2 * Din:]
    # Split w2/b2 column-wise (new_s / new_p / new_o blocks).
    w2_s, w2_pr, w2_o = w2[:, :H], w2[:, H:H + Dout], w2[:, H + Dout:]
    b2_s, b2_pr, b2_o = b2[:, :H], b2[:, H:H + Dout], b2[:, H + Dout:]

    wp = lambda w, r, c: pad2(w, r, c).astype(mxu_dtype)
    bp = lambda b, c: pad2(b, 1, c).astype(f32)

    # Stacked edge indices (subject rows first, then object rows), padded with -1.
    s_idx = edges[:, 0].astype(jnp.int32)
    o_idx = edges[:, 1].astype(jnp.int32)
    pad_amt = T_p - T
    s_idx = jnp.pad(s_idx, (0, pad_amt), constant_values=-1)
    o_idx = jnp.pad(o_idx, (0, pad_amt), constant_values=-1)
    so_idx = jnp.concatenate([s_idx, o_idx])                 # (2*T_p,)
    so_col = so_idx.reshape(2 * T_p, 1)
    so_row = so_idx.reshape(1, 2 * T_p)

    kernel_inputs = (
        so_col, so_row,
        obj_p, pred_p,
        wp(w1_s, Din_p, H_p), wp(w1_pr, Din_p, H_p), wp(w1_o, Din_p, H_p), bp(b1, H_p),
        wp(w2_s, H_p, H_p), wp(w2_pr, H_p, Dout_p), wp(w2_o, H_p, H_p),
        bp(b2_s, H_p), bp(b2_pr, Dout_p), bp(b2_o, H_p),
        wp(w3, H_p, H_p), bp(b3, H_p),
        wp(w4, H_p, Dout_p), bp(b4, Dout_p),
    )

    def full_spec(shape):
        return pl.BlockSpec(shape, lambda i: (0,) * len(shape))

    out_dtype = obj_vecs.dtype
    new_obj_p, new_p_p = pl.pallas_call(
        _graph_conv_kernel,
        out_shape=(jax.ShapeDtypeStruct((O_p, Dout_p), out_dtype),
                   jax.ShapeDtypeStruct((T_p, Dout_p), out_dtype)),
        grid=(1,),
        in_specs=[full_spec(x.shape) for x in kernel_inputs],
        out_specs=(full_spec((O_p, Dout_p)), full_spec((T_p, Dout_p))),
        compiler_params=pltpu.CompilerParams(
            dimension_semantics=("arbitrary",)),
    )(*kernel_inputs)

    # Strip padding (outside the kernel; cheap XLA slices).
    return new_obj_p[:O, :Dout], new_p_p[:T, :Dout]


def _reference_forward(obj_vecs, pred_vecs, edges, params, *, hidden_dim, output_dim):
    """Pure-JAX reference mirroring the PyTorch module (pooling='avg')."""
    H, Dout = hidden_dim, output_dim
    w1, b1, w2, b2, w3, b3, w4, b4 = params
    O = obj_vecs.shape[0]
    s_idx = edges[:, 0]
    o_idx = edges[:, 1]
    cur_t = jnp.concatenate([obj_vecs[s_idx], pred_vecs, obj_vecs[o_idx]], axis=1)
    h1 = jnp.maximum(cur_t @ w1 + b1[0], 0.0)
    t2 = jnp.maximum(h1 @ w2 + b2[0], 0.0)
    new_s, new_p, new_o = t2[:, :H], t2[:, H:H + Dout], t2[:, H + Dout:2 * H + Dout]
    pooled = jnp.zeros((O, H), obj_vecs.dtype)
    pooled = pooled.at[s_idx].add(new_s).at[o_idx].add(new_o)
    counts = jnp.zeros((O,), obj_vecs.dtype).at[s_idx].add(1.0).at[o_idx].add(1.0)
    pooled = pooled / jnp.maximum(counts, 1.0)[:, None]
    h3 = jnp.maximum(pooled @ w3 + b3[0], 0.0)
    new_obj = jnp.maximum(h3 @ w4 + b4[0], 0.0)
    return new_obj, new_p


def init_params(key, input_dim, hidden_dim, output_dim):
    Din, H, Dout = input_dim, hidden_dim, output_dim
    ks = jax.random.split(key, 8)

    def lin(kw, kb, fan_in, fan_out):
        bound = 1.0 / jnp.sqrt(fan_in)
        w = jax.random.uniform(kw, (fan_in, fan_out), jnp.float32, -bound, bound)
        b = jax.random.uniform(kb, (1, fan_out), jnp.float32, -bound, bound)
        return w, b

    w1, b1 = lin(ks[0], ks[1], 3 * Din, H)
    w2, b2 = lin(ks[2], ks[3], H, 2 * H + Dout)
    w3, b3 = lin(ks[4], ks[5], H, H)
    w4, b4 = lin(ks[6], ks[7], H, Dout)
    return (w1, b1, w2, b2, w3, b3, w4, b4)


if __name__ == "__main__":
    input_dim, hidden_dim, output_dim = 32, 64, 32
    O, T = 16, 24

    key = jax.random.PRNGKey(0)
    k_obj, k_pred, k_edge, k_param = jax.random.split(key, 4)

    obj_vecs = jax.random.normal(k_obj, (O, input_dim), jnp.float32)
    pred_vecs = jax.random.normal(k_pred, (T, input_dim), jnp.float32)
    edges = jax.random.randint(k_edge, (T, 2), 0, O, jnp.int32)
    params = init_params(k_param, input_dim, hidden_dim, output_dim)

    new_obj, new_p = graph_conv_forward(
        obj_vecs, pred_vecs, edges, params,
        hidden_dim=hidden_dim, output_dim=output_dim)
    jax.block_until_ready((new_obj, new_p))

    ref_obj, ref_p = _reference_forward(
        obj_vecs, pred_vecs, edges, params,
        hidden_dim=hidden_dim, output_dim=output_dim)

    assert new_obj.shape == (O, output_dim) and new_p.shape == (T, output_dim)
    # bf16 MXU operands + approx reciprocal => compare against f32 reference at
    # a correspondingly relaxed tolerance.
    assert jnp.allclose(new_obj, ref_obj, atol=5e-2, rtol=5e-2)
    assert jnp.allclose(new_p, ref_p, atol=5e-2, rtol=5e-2)

    print("KERNEL_OK")
</pallas_src>

<mosaic_0001>
module attributes {stable_mosaic.version = 11 : i64} {
  func.func @_graph_conv_kernel(%arg0: i32, %arg1: memref<48x1xi32, #tpu.memory_space<vmem>>, %arg2: memref<1x48xi32, #tpu.memory_space<vmem>>, %arg3: memref<16x128xbf16, #tpu.memory_space<vmem>>, %arg4: memref<24x128xbf16, #tpu.memory_space<vmem>>, %arg5: memref<128x128xbf16, #tpu.memory_space<vmem>>, %arg6: memref<128x128xbf16, #tpu.memory_space<vmem>>, %arg7: memref<128x128xbf16, #tpu.memory_space<vmem>>, %arg8: memref<1x128xf32, #tpu.memory_space<vmem>>, %arg9: memref<128x128xbf16, #tpu.memory_space<vmem>>, %arg10: memref<128x128xbf16, #tpu.memory_space<vmem>>, %arg11: memref<128x128xbf16, #tpu.memory_space<vmem>>, %arg12: memref<1x128xf32, #tpu.memory_space<vmem>>, %arg13: memref<1x128xf32, #tpu.memory_space<vmem>>, %arg14: memref<1x128xf32, #tpu.memory_space<vmem>>, %arg15: memref<128x128xbf16, #tpu.memory_space<vmem>>, %arg16: memref<1x128xf32, #tpu.memory_space<vmem>>, %arg17: memref<128x128xbf16, #tpu.memory_space<vmem>>, %arg18: memref<1x128xf32, #tpu.memory_space<vmem>>, %arg19: memref<16x128xf32, #tpu.memory_space<vmem>>, %arg20: memref<24x128xf32, #tpu.memory_space<vmem>>) attributes {dimension_semantics = [#tpu.dimension_semantics<arbitrary>], iteration_bounds = array<i64: 1>, scalar_prefetch = 0 : i64, scratch_operands = 0 : i64, tpu.core_type = #tpu.core_type<tc>, window_params = [{pipeline_mode = #tpu.pipeline_mode<synchronous>, transform_indices = @transform_0, window_bounds = array<i64: 48, 1>}, {pipeline_mode = #tpu.pipeline_mode<synchronous>, transform_indices = @transform_1, window_bounds = array<i64: 1, 48>}, {pipeline_mode = #tpu.pipeline_mode<synchronous>, transform_indices = @transform_2, window_bounds = array<i64: 16, 128>}, {pipeline_mode = #tpu.pipeline_mode<synchronous>, transform_indices = @transform_3, window_bounds = array<i64: 24, 128>}, {pipeline_mode = #tpu.pipeline_mode<synchronous>, transform_indices = @transform_4, window_bounds = array<i64: 128, 128>}, {pipeline_mode = #tpu.pipeline_mode<synchronous>, transform_indices = @transform_5, window_bounds = array<i64: 128, 128>}, {pipeline_mode = #tpu.pipeline_mode<synchronous>, transform_indices = @transform_6, window_bounds = array<i64: 128, 128>}, {pipeline_mode = #tpu.pipeline_mode<synchronous>, transform_indices = @transform_7, window_bounds = array<i64: 1, 128>}, {pipeline_mode = #tpu.pipeline_mode<synchronous>, transform_indices = @transform_8, window_bounds = array<i64: 128, 128>}, {pipeline_mode = #tpu.pipeline_mode<synchronous>, transform_indices = @transform_9, window_bounds = array<i64: 128, 128>}, {pipeline_mode = #tpu.pipeline_mode<synchronous>, transform_indices = @transform_10, window_bounds = array<i64: 128, 128>}, {pipeline_mode = #tpu.pipeline_mode<synchronous>, transform_indices = @transform_11, window_bounds = array<i64: 1, 128>}, {pipeline_mode = #tpu.pipeline_mode<synchronous>, transform_indices = @transform_12, window_bounds = array<i64: 1, 128>}, {pipeline_mode = #tpu.pipeline_mode<synchronous>, transform_indices = @transform_13, window_bounds = array<i64: 1, 128>}, {pipeline_mode = #tpu.pipeline_mode<synchronous>, transform_indices = @transform_14, window_bounds = array<i64: 128, 128>}, {pipeline_mode = #tpu.pipeline_mode<synchronous>, transform_indices = @transform_15, window_bounds = array<i64: 1, 128>}, {pipeline_mode = #tpu.pipeline_mode<synchronous>, transform_indices = @transform_16, window_bounds = array<i64: 128, 128>}, {pipeline_mode = #tpu.pipeline_mode<synchronous>, transform_indices = @transform_17, window_bounds = array<i64: 1, 128>}, {pipeline_mode = #tpu.pipeline_mode<synchronous>, transform_indices = @transform_18, window_bounds = array<i64: 16, 128>}, {pipeline_mode = #tpu.pipeline_mode<synchronous>, transform_indices = @transform_19, window_bounds = array<i64: 24, 128>}]} {
    %c0 = arith.constant 0 : index
    %c0_0 = arith.constant 0 : index
    %0 = vector.load %arg1[%c0, %c0_0] : memref<48x1xi32, #tpu.memory_space<vmem>>, vector<48x1xi32>
    %c0_1 = arith.constant 0 : index
    %c0_2 = arith.constant 0 : index
    %1 = vector.load %arg2[%c0_1, %c0_2] : memref<1x48xi32, #tpu.memory_space<vmem>>, vector<1x48xi32>
    %2 = tpu.iota {dimensions = array<i32: 1>} : vector<48x16xi32>
    %3 = vector.broadcast %0 : vector<48x1xi32> to vector<48x16xi32>
    %4 = arith.cmpi eq, %2, %3 : vector<48x16xi32>
    %5 = arith.extui %4 : vector<48x16xi1> to vector<48x16xi32>
    %6 = arith.sitofp %5 : vector<48x16xi32> to vector<48x16xf32>
    %7 = arith.truncf %6 : vector<48x16xf32> to vector<48x16xbf16>
    %8 = tpu.iota {dimensions = array<i32: 0>} : vector<16x48xi32>
    %9 = vector.broadcast %1 : vector<1x48xi32> to vector<16x48xi32>
    %10 = arith.cmpi eq, %8, %9 : vector<16x48xi32>
    %11 = arith.extui %10 : vector<16x48xi1> to vector<16x48xi32>
    %12 = arith.sitofp %11 : vector<16x48xi32> to vector<16x48xf32>
    %13 = arith.truncf %12 : vector<16x48xf32> to vector<16x48xbf16>
    %c0_3 = arith.constant 0 : index
    %c0_4 = arith.constant 0 : index
    %14 = vector.load %arg3[%c0_3, %c0_4] : memref<16x128xbf16, #tpu.memory_space<vmem>>, vector<16x128xbf16>
    %cst = arith.constant dense<0.000000e+00> : vector<48x128xf32>
    %15 = tpu.matmul %7, %14, %cst {dimension_numbers = #tpu.dot_dimension_numbers<[1], [0], [0], [1], [0, 0, 1, 1], [], []>} : vector<48x16xbf16>, vector<16x128xbf16>, vector<48x128xf32> -> vector<48x128xf32>
    %16 = vector.extract_strided_slice %15 {offsets = [0, 0], sizes = [24, 128], strides = [1, 1]} : vector<48x128xf32> to vector<24x128xf32>
    %17 = arith.truncf %16 : vector<24x128xf32> to vector<24x128xbf16>
    %18 = vector.extract_strided_slice %15 {offsets = [24, 0], sizes = [24, 128], strides = [1, 1]} : vector<48x128xf32> to vector<24x128xf32>
    %19 = arith.truncf %18 : vector<24x128xf32> to vector<24x128xbf16>
    %c0_5 = arith.constant 0 : index
    %c0_6 = arith.constant 0 : index
    %20 = vector.load %arg5[%c0_5, %c0_6] : memref<128x128xbf16, #tpu.memory_space<vmem>>, vector<128x128xbf16>
    %cst_7 = arith.constant dense<0.000000e+00> : vector<24x128xf32>
    %21 = tpu.matmul %17, %20, %cst_7 {dimension_numbers = #tpu.dot_dimension_numbers<[1], [0], [0], [1], [0, 0, 1, 1], [], []>} : vector<24x128xbf16>, vector<128x128xbf16>, vector<24x128xf32> -> vector<24x128xf32>
    %c0_8 = arith.constant 0 : index
    %c0_9 = arith.constant 0 : index
    %22 = vector.load %arg4[%c0_8, %c0_9] : memref<24x128xbf16, #tpu.memory_space<vmem>>, vector<24x128xbf16>
    %c0_10 = arith.constant 0 : index
    %c0_11 = arith.constant 0 : index
    %23 = vector.load %arg6[%c0_10, %c0_11] : memref<128x128xbf16, #tpu.memory_space<vmem>>, vector<128x128xbf16>
    %cst_12 = arith.constant dense<0.000000e+00> : vector<24x128xf32>
    %24 = tpu.matmul %22, %23, %cst_12 {dimension_numbers = #tpu.dot_dimension_numbers<[1], [0], [0], [1], [0, 0, 1, 1], [], []>} : vector<24x128xbf16>, vector<128x128xbf16>, vector<24x128xf32> -> vector<24x128xf32>
    %25 = arith.addf %21, %24 : vector<24x128xf32>
    %c0_13 = arith.constant 0 : index
    %c0_14 = arith.constant 0 : index
    %26 = vector.load %arg7[%c0_13, %c0_14] : memref<128x128xbf16, #tpu.memory_space<vmem>>, vector<128x128xbf16>
    %cst_15 = arith.constant dense<0.000000e+00> : vector<24x128xf32>
    %27 = tpu.matmul %19, %26, %cst_15 {dimension_numbers = #tpu.dot_dimension_numbers<[1], [0], [0], [1], [0, 0, 1, 1], [], []>} : vector<24x128xbf16>, vector<128x128xbf16>, vector<24x128xf32> -> vector<24x128xf32>
    %28 = arith.addf %25, %27 : vector<24x128xf32>
    %c0_16 = arith.constant 0 : index
    %c0_17 = arith.constant 0 : index
    %29 = vector.load %arg8[%c0_16, %c0_17] : memref<1x128xf32, #tpu.memory_space<vmem>>, vector<1x128xf32>
    %30 = vector.broadcast %29 : vector<1x128xf32> to vector<24x128xf32>
    %31 = arith.addf %28, %30 : vector<24x128xf32>
    %cst_18 = arith.constant 0.000000e+00 : f32
    %32 = vector.broadcast %cst_18 : f32 to vector<24x128xf32>
    %33 = arith.maximumf %31, %32 : vector<24x128xf32>
    %34 = arith.truncf %33 : vector<24x128xf32> to vector<24x128xbf16>
    %c0_19 = arith.constant 0 : index
    %c0_20 = arith.constant 0 : index
    %35 = vector.load %arg9[%c0_19, %c0_20] : memref<128x128xbf16, #tpu.memory_space<vmem>>, vector<128x128xbf16>
    %cst_21 = arith.constant dense<0.000000e+00> : vector<24x128xf32>
    %36 = tpu.matmul %34, %35, %cst_21 {dimension_numbers = #tpu.dot_dimension_numbers<[1], [0], [0], [1], [0, 0, 1, 1], [], []>} : vector<24x128xbf16>, vector<128x128xbf16>, vector<24x128xf32> -> vector<24x128xf32>
    %c0_22 = arith.constant 0 : index
    %c0_23 = arith.constant 0 : index
    %37 = vector.load %arg12[%c0_22, %c0_23] : memref<1x128xf32, #tpu.memory_space<vmem>>, vector<1x128xf32>
    %38 = vector.broadcast %37 : vector<1x128xf32> to vector<24x128xf32>
    %39 = arith.addf %36, %38 : vector<24x128xf32>
    %cst_24 = arith.constant 0.000000e+00 : f32
    %40 = vector.broadcast %cst_24 : f32 to vector<24x128xf32>
    %41 = arith.maximumf %39, %40 : vector<24x128xf32>
    %c0_25 = arith.constant 0 : index
    %c0_26 = arith.constant 0 : index
    %42 = vector.load %arg10[%c0_25, %c0_26] : memref<128x128xbf16, #tpu.memory_space<vmem>>, vector<128x128xbf16>
    %cst_27 = arith.constant dense<0.000000e+00> : vector<24x128xf32>
    %43 = tpu.matmul %34, %42, %cst_27 {dimension_numbers = #tpu.dot_dimension_numbers<[1], [0], [0], [1], [0, 0, 1, 1], [], []>} : vector<24x128xbf16>, vector<128x128xbf16>, vector<24x128xf32> -> vector<24x128xf32>
    %c0_28 = arith.constant 0 : index
    %c0_29 = arith.constant 0 : index
    %44 = vector.load %arg13[%c0_28, %c0_29] : memref<1x128xf32, #tpu.memory_space<vmem>>, vector<1x128xf32>
    %45 = vector.broadcast %44 : vector<1x128xf32> to vector<24x128xf32>
    %46 = arith.addf %43, %45 : vector<24x128xf32>
    %cst_30 = arith.constant 0.000000e+00 : f32
    %47 = vector.broadcast %cst_30 : f32 to vector<24x128xf32>
    %48 = arith.maximumf %46, %47 : vector<24x128xf32>
    %c0_31 = arith.constant 0 : index
    %c0_32 = arith.constant 0 : index
    %49 = vector.load %arg11[%c0_31, %c0_32] : memref<128x128xbf16, #tpu.memory_space<vmem>>, vector<128x128xbf16>
    %cst_33 = arith.constant dense<0.000000e+00> : vector<24x128xf32>
    %50 = tpu.matmul %34, %49, %cst_33 {dimension_numbers = #tpu.dot_dimension_numbers<[1], [0], [0], [1], [0, 0, 1, 1], [], []>} : vector<24x128xbf16>, vector<128x128xbf16>, vector<24x128xf32> -> vector<24x128xf32>
    %c0_34 = arith.constant 0 : index
    %c0_35 = arith.constant 0 : index
    %51 = vector.load %arg14[%c0_34, %c0_35] : memref<1x128xf32, #tpu.memory_space<vmem>>, vector<1x128xf32>
    %52 = vector.broadcast %51 : vector<1x128xf32> to vector<24x128xf32>
    %53 = arith.addf %50, %52 : vector<24x128xf32>
    %cst_36 = arith.constant 0.000000e+00 : f32
    %54 = vector.broadcast %cst_36 : f32 to vector<24x128xf32>
    %55 = arith.maximumf %53, %54 : vector<24x128xf32>
    %56 = tpu.concatenate %41, %55 in 0 : vector<24x128xf32>, vector<24x128xf32> -> vector<48x128xf32>
    %57 = arith.truncf %56 : vector<48x128xf32> to vector<48x128xbf16>
    %cst_37 = arith.constant dense<0.000000e+00> : vector<16x128xf32>
    %58 = tpu.matmul %13, %57, %cst_37 {dimension_numbers = #tpu.dot_dimension_numbers<[1], [0], [0], [1], [0, 0, 1, 1], [], []>} : vector<16x48xbf16>, vector<48x128xbf16>, vector<16x128xf32> -> vector<16x128xf32>
    %cst_38 = arith.constant dense<0.000000e+00> : vector<16xf32>
    %59 = vector.multi_reduction <add>, %12, %cst_38 [1] : vector<16x48xf32> to vector<16xf32>
    %60 = vector.shape_cast %59 : vector<16xf32> to vector<16x1xf32>
    %cst_39 = arith.constant 1.000000e+00 : f32
    %61 = vector.broadcast %cst_39 : f32 to vector<16x1xf32>
    %62 = arith.maximumf %60, %61 : vector<16x1xf32>
    %63 = tpu.reciprocal %62 {approx = true} : vector<16x1xf32> -> vector<16x1xf32>
    %64 = vector.broadcast %63 : vector<16x1xf32> to vector<16x128xf32>
    %65 = arith.mulf %58, %64 : vector<16x128xf32>
    %66 = arith.truncf %65 : vector<16x128xf32> to vector<16x128xbf16>
    %c0_40 = arith.constant 0 : index
    %c0_41 = arith.constant 0 : index
    %67 = vector.load %arg15[%c0_40, %c0_41] : memref<128x128xbf16, #tpu.memory_space<vmem>>, vector<128x128xbf16>
    %cst_42 = arith.constant dense<0.000000e+00> : vector<16x128xf32>
    %68 = tpu.matmul %66, %67, %cst_42 {dimension_numbers = #tpu.dot_dimension_numbers<[1], [0], [0], [1], [0, 0, 1, 1], [], []>} : vector<16x128xbf16>, vector<128x128xbf16>, vector<16x128xf32> -> vector<16x128xf32>
    %c0_43 = arith.constant 0 : index
    %c0_44 = arith.constant 0 : index
    %69 = vector.load %arg16[%c0_43, %c0_44] : memref<1x128xf32, #tpu.memory_space<vmem>>, vector<1x128xf32>
    %70 = vector.broadcast %69 : vector<1x128xf32> to vector<16x128xf32>
    %71 = arith.addf %68, %70 : vector<16x128xf32>
    %cst_45 = arith.constant 0.000000e+00 : f32
    %72 = vector.broadcast %cst_45 : f32 to vector<16x128xf32>
    %73 = arith.maximumf %71, %72 : vector<16x128xf32>
    %74 = arith.truncf %73 : vector<16x128xf32> to vector<16x128xbf16>
    %c0_46 = arith.constant 0 : index
    %c0_47 = arith.constant 0 : index
    %75 = vector.load %arg17[%c0_46, %c0_47] : memref<128x128xbf16, #tpu.memory_space<vmem>>, vector<128x128xbf16>
    %cst_48 = arith.constant dense<0.000000e+00> : vector<16x128xf32>
    %76 = tpu.matmul %74, %75, %cst_48 {dimension_numbers = #tpu.dot_dimension_numbers<[1], [0], [0], [1], [0, 0, 1, 1], [], []>} : vector<16x128xbf16>, vector<128x128xbf16>, vector<16x128xf32> -> vector<16x128xf32>
    %c0_49 = arith.constant 0 : index
    %c0_50 = arith.constant 0 : index
    %77 = vector.load %arg18[%c0_49, %c0_50] : memref<1x128xf32, #tpu.memory_space<vmem>>, vector<1x128xf32>
    %78 = vector.broadcast %77 : vector<1x128xf32> to vector<16x128xf32>
    %79 = arith.addf %76, %78 : vector<16x128xf32>
    %cst_51 = arith.constant 0.000000e+00 : f32
    %80 = vector.broadcast %cst_51 : f32 to vector<16x128xf32>
    %81 = arith.maximumf %79, %80 : vector<16x128xf32>
    %c0_52 = arith.constant 0 : index
    %c0_53 = arith.constant 0 : index
    %82 = vector.load %arg19[%c0_52, %c0_53] : memref<16x128xf32, #tpu.memory_space<vmem>>, vector<16x128xf32>
    tpu.vector_store %arg19[%c0_52, %c0_53], %81 {strides = array<i32>} : memref<16x128xf32, #tpu.memory_space<vmem>>, vector<16x128xf32>,
    %c0_54 = arith.constant 0 : index
    %c0_55 = arith.constant 0 : index
    %83 = vector.load %arg20[%c0_54, %c0_55] : memref<24x128xf32, #tpu.memory_space<vmem>>, vector<24x128xf32>
    tpu.vector_store %arg20[%c0_54, %c0_55], %48 {strides = array<i32>} : memref<24x128xf32, #tpu.memory_space<vmem>>, vector<24x128xf32>,
    return
  }
  func.func @transform_0(%arg0: i32) -> (i32, i32) {
    %c0_i32 = arith.constant 0 : i32
    %c0_i32_0 = arith.constant 0 : i32
    %c0_i32_1 = arith.constant 0 : i32
    return %c0_i32, %c0_i32_0 : i32, i32
  }
  func.func @transform_1(%arg0: i32) -> (i32, i32) {
    %c0_i32 = arith.constant 0 : i32
    %c0_i32_0 = arith.constant 0 : i32
    %c0_i32_1 = arith.constant 0 : i32
    return %c0_i32, %c0_i32_0 : i32, i32
  }
  func.func @transform_2(%arg0: i32) -> (i32, i32) {
    %c0_i32 = arith.constant 0 : i32
    %c0_i32_0 = arith.constant 0 : i32
    %c0_i32_1 = arith.constant 0 : i32
    return %c0_i32, %c0_i32_0 : i32, i32
  }
  func.func @transform_3(%arg0: i32) -> (i32, i32) {
    %c0_i32 = arith.constant 0 : i32
    %c0_i32_0 = arith.constant 0 : i32
    %c0_i32_1 = arith.constant 0 : i32
    return %c0_i32, %c0_i32_0 : i32, i32
  }
  func.func @transform_4(%arg0: i32) -> (i32, i32) {
    %c0_i32 = arith.constant 0 : i32
    %c0_i32_0 = arith.constant 0 : i32
    %c0_i32_1 = arith.constant 0 : i32
    return %c0_i32, %c0_i32_0 : i32, i32
  }
  func.func @transform_5(%arg0: i32) -> (i32, i32) {
    %c0_i32 = arith.constant 0 : i32
    %c0_i32_0 = arith.constant 0 : i32
    %c0_i32_1 = arith.constant 0 : i32
    return %c0_i32, %c0_i32_0 : i32, i32
  }
  func.func @transform_6(%arg0: i32) -> (i32, i32) {
    %c0_i32 = arith.constant 0 : i32
    %c0_i32_0 = arith.constant 0 : i32
    %c0_i32_1 = arith.constant 0 : i32
    return %c0_i32, %c0_i32_0 : i32, i32
  }
  func.func @transform_7(%arg0: i32) -> (i32, i32) {
    %c0_i32 = arith.constant 0 : i32
    %c0_i32_0 = arith.constant 0 : i32
    %c0_i32_1 = arith.constant 0 : i32
    return %c0_i32, %c0_i32_0 : i32, i32
  }
  func.func @transform_8(%arg0: i32) -> (i32, i32) {
    %c0_i32 = arith.constant 0 : i32
    %c0_i32_0 = arith.constant 0 : i32
    %c0_i32_1 = arith.constant 0 : i32
    return %c0_i32, %c0_i32_0 : i32, i32
  }
  func.func @transform_9(%arg0: i32) -> (i32, i32) {
    %c0_i32 = arith.constant 0 : i32
    %c0_i32_0 = arith.constant 0 : i32
    %c0_i32_1 = arith.constant 0 : i32
    return %c0_i32, %c0_i32_0 : i32, i32
  }
  func.func @transform_10(%arg0: i32) -> (i32, i32) {
    %c0_i32 = arith.constant 0 : i32
    %c0_i32_0 = arith.constant 0 : i32
    %c0_i32_1 = arith.constant 0 : i32
    return %c0_i32, %c0_i32_0 : i32, i32
  }
  func.func @transform_11(%arg0: i32) -> (i32, i32) {
    %c0_i32 = arith.constant 0 : i32
    %c0_i32_0 = arith.constant 0 : i32
    %c0_i32_1 = arith.constant 0 : i32
    return %c0_i32, %c0_i32_0 : i32, i32
  }
  func.func @transform_12(%arg0: i32) -> (i32, i32) {
    %c0_i32 = arith.constant 0 : i32
    %c0_i32_0 = arith.constant 0 : i32
    %c0_i32_1 = arith.constant 0 : i32
    return %c0_i32, %c0_i32_0 : i32, i32
  }
  func.func @transform_13(%arg0: i32) -> (i32, i32) {
    %c0_i32 = arith.constant 0 : i32
    %c0_i32_0 = arith.constant 0 : i32
    %c0_i32_1 = arith.constant 0 : i32
    return %c0_i32, %c0_i32_0 : i32, i32
  }
  func.func @transform_14(%arg0: i32) -> (i32, i32) {
    %c0_i32 = arith.constant 0 : i32
    %c0_i32_0 = arith.constant 0 : i32
    %c0_i32_1 = arith.constant 0 : i32
    return %c0_i32, %c0_i32_0 : i32, i32
  }
  func.func @transform_15(%arg0: i32) -> (i32, i32) {
    %c0_i32 = arith.constant 0 : i32
    %c0_i32_0 = arith.constant 0 : i32
    %c0_i32_1 = arith.constant 0 : i32
    return %c0_i32, %c0_i32_0 : i32, i32
  }
  func.func @transform_16(%arg0: i32) -> (i32, i32) {
    %c0_i32 = arith.constant 0 : i32
    %c0_i32_0 = arith.constant 0 : i32
    %c0_i32_1 = arith.constant 0 : i32
    return %c0_i32, %c0_i32_0 : i32, i32
  }
  func.func @transform_17(%arg0: i32) -> (i32, i32) {
    %c0_i32 = arith.constant 0 : i32
    %c0_i32_0 = arith.constant 0 : i32
    %c0_i32_1 = arith.constant 0 : i32
    return %c0_i32, %c0_i32_0 : i32, i32
  }
  func.func @transform_18(%arg0: i32) -> (i32, i32) {
    %c0_i32 = arith.constant 0 : i32
    %c0_i32_0 = arith.constant 0 : i32
    %c0_i32_1 = arith.constant 0 : i32
    return %c0_i32, %c0_i32_0 : i32, i32
  }
  func.func @transform_19(%arg0: i32) -> (i32, i32) {
    %c0_i32 = arith.constant 0 : i32
    %c0_i32_0 = arith.constant 0 : i32
    %c0_i32_1 = arith.constant 0 : i32
    return %c0_i32, %c0_i32_0 : i32, i32
  }
}

</mosaic_0001>

<llo_original>
// kernel: tpu_custom_call.1
$region0: #{tpu_custom_call.1}
  #allocation0 [shape = 'u32[]', space=smem, size = 0x4, offset = 0x4, fixed_abs, tag = 'smem constant byte address 0x4 - core index']
  #allocation1 [shape = 'u32[72,128]{1,0:T(1,128)}', space=vmem, size = 0x9000, scoped, tag = 'internal scratch']
  %s0 = inlined_call_operand.vmem [shape: s32[48,1], index: 0, kind: input, shape index: {}]
  %s1 = inlined_call_operand.hbm [shape: s32[1,48], index: 1, kind: input, shape index: {}]
  %s2 = inlined_call_operand.hbm [shape: bf16[16,128], index: 2, kind: input, shape index: {}]
  %s3 = inlined_call_operand.hbm [shape: bf16[24,128], index: 3, kind: input, shape index: {}]
  %s4 = inlined_call_operand.hbm [shape: bf16[128,128], index: 4, kind: input, shape index: {}]
  %s5 = inlined_call_operand.hbm [shape: bf16[128,128], index: 5, kind: input, shape index: {}]
  %s6 = inlined_call_operand.hbm [shape: bf16[128,128], index: 6, kind: input, shape index: {}]
  %s7 = inlined_call_operand.hbm [shape: f32[1,128], index: 7, kind: input, shape index: {}]
  %s8 = inlined_call_operand.hbm [shape: bf16[128,128], index: 8, kind: input, shape index: {}]
  %s9 = inlined_call_operand.hbm [shape: bf16[128,128], index: 9, kind: input, shape index: {}]
  %s10 = inlined_call_operand.hbm [shape: bf16[128,128], index: 10, kind: input, shape index: {}]
  %s11 = inlined_call_operand.hbm [shape: f32[1,128], index: 11, kind: input, shape index: {}]
  %s12 = inlined_call_operand.hbm [shape: f32[1,128], index: 12, kind: input, shape index: {}]
  %s13 = inlined_call_operand.hbm [shape: f32[1,128], index: 13, kind: input, shape index: {}]
  %s14 = inlined_call_operand.hbm [shape: bf16[128,128], index: 14, kind: input, shape index: {}]
  %s15 = inlined_call_operand.hbm [shape: f32[1,128], index: 15, kind: input, shape index: {}]
  %s16 = inlined_call_operand.vmem [shape: bf16[128,128], index: 16, kind: input, shape index: {}]
  %s17 = inlined_call_operand.vmem [shape: f32[1,128], index: 17, kind: input, shape index: {}]
  %s18 = inlined_call_operand.hbm [shape: f32[16,128], index: 18, kind: output, shape index: {0}]
  %s19 = inlined_call_operand.hbm [shape: f32[24,128], index: 19, kind: output, shape index: {1}]
  %20 = xla_tuple %s18, %s19
  %s21 = sld [smem:[#allocation0]]
  $region150: #{tpu_custom_call.1} parent=0
    _
  %s23 = ssub.s32 1, %s21
  %s24 = scalar_select 0, %s23, %s21
  $region1: #{tpu_custom_call.1} parent=0
    #allocation2 [shape = 'u8[512]{0}', space=vmem, size = 0x400, scoped, tag = 'input window, operand 1, single buffered']
    #allocation3 [shape = 's32[1]{0}', space=sflag, size = 0x4, scoped, tag = 'scoped memory for tpu_custom_call.1']
    #allocation4 [shape = 's32[1]{0}', space=sflag, size = 0x4, scoped, tag = 'scoped memory for tpu_custom_call.1']
    #allocation5 [shape = 'u8[4096]{0}', space=vmem, size = 0x1000, scoped, tag = 'input window, operand 2, single buffered']
    #allocation6 [shape = 's32[1]{0}', space=sflag, size = 0x4, scoped, tag = 'scoped memory for tpu_custom_call.1']
    #allocation7 [shape = 'u8[6144]{0}', space=vmem, size = 0x1800, scoped, tag = 'input window, operand 3, single buffered']
    #allocation8 [shape = 'u8[32768]{0}', space=vmem, size = 0x8000, scoped, tag = 'input window, operand 4, single buffered']
    #allocation9 [shape = 's32[1]{0}', space=sflag, size = 0x4, scoped, tag = 'scoped memory for tpu_custom_call.1']
    #allocation10 [shape = 'u8[32768]{0}', space=vmem, size = 0x8000, scoped, tag = 'input window, operand 5, single buffered']
    #allocation11 [shape = 'u8[32768]{0}', space=vmem, size = 0x8000, scoped, tag = 'input window, operand 6, single buffered']
    #allocation12 [shape = 's32[1]{0}', space=sflag, size = 0x4, scoped, tag = 'scoped memory for tpu_custom_call.1']
    #allocation13 [shape = 'u8[512]{0}', space=vmem, size = 0x400, scoped, tag = 'input window, operand 7, single buffered']
    #allocation14 [shape = 'u8[32768]{0}', space=vmem, size = 0x8000, scoped, tag = 'input window, operand 8, single buffered']
    #allocation15 [shape = 's32[1]{0}', space=sflag, size = 0x4, scoped, tag = 'scoped memory for tpu_custom_call.1']
    #allocation16 [shape = 'u8[32768]{0}', space=vmem, size = 0x8000, scoped, tag = 'input window, operand 9, single buffered']
    #allocation17 [shape = 'u8[32768]{0}', space=vmem, size = 0x8000, scoped, tag = 'input window, operand 10, single buffered']
    #allocation18 [shape = 's32[1]{0}', space=sflag, size = 0x4, scoped, tag = 'scoped memory for tpu_custom_call.1']
    #allocation19 [shape = 'u8[512]{0}', space=vmem, size = 0x400, scoped, tag = 'input window, operand 11, single buffered']
    #allocation20 [shape = 'u8[512]{0}', space=vmem, size = 0x400, scoped, tag = 'input window, operand 12, single buffered']
    #allocation21 [shape = 's32[1]{0}', space=sflag, size = 0x4, scoped, tag = 'scoped memory for tpu_custom_call.1']
    #allocation22 [shape = 'u8[512]{0}', space=vmem, size = 0x400, scoped, tag = 'input window, operand 13, single buffered']
    #allocation23 [shape = 'u8[32768]{0}', space=vmem, size = 0x8000, scoped, tag = 'input window, operand 14, single buffered']
    #allocation24 [shape = 's32[1]{0}', space=sflag, size = 0x4, scoped, tag = 'scoped memory for tpu_custom_call.1']
    #allocation25 [shape = 'u8[512]{0}', space=vmem, size = 0x400, scoped, tag = 'input window, operand 15, single buffered']
    #allocation26 [shape = 'u8[8192]{0}', space=vmem, size = 0x2000, scoped, tag = 'output window, operand 0, single buffered']
    #allocation27 [shape = 'u8[12288]{0}', space=vmem, size = 0x3000, scoped, tag = 'output window, operand 1, single buffered']
    #allocation28 [shape = 's32[1]{0}', space=sflag, size = 0x4, scoped, tag = 'scoped memory for tpu_custom_call.1']
    %25 = vsyncpa [#allocation3], 0
    %26 = vsyncpa [#allocation6], 0
    %27 = vsyncpa [#allocation9], 0
    %28 = vsyncpa [#allocation12], 0
    %29 = vsyncpa [#allocation15], 0
    %30 = vsyncpa [#allocation18], 0
    %31 = vsyncpa [#allocation21], 0
    %32 = vsyncpa [#allocation24], 0
    %33 = vsyncpa [#allocation4], 0
    %34 = vsyncpa [#allocation28], 0
    // Predicated region
    $region2: #{tpu_custom_call.1} parent=1 // pred_check
      _
    $region3: #{tpu_custom_call.1} parent=1 // pred_check_branch
      %36 = sbr.rel (0) target = $region5
    $region4: #{tpu_custom_call.1} parent=1 // pred_region
      _
    $region5: #{tpu_custom_call.1} parent=1 // pred_fallthru
      _
    // Predicated region
    $region6: #{tpu_custom_call.1} parent=1 // pred_check
      _
    $region7: #{tpu_custom_call.1} parent=1 // pred_check_branch
      %38 = sbr.rel (0) target = $region9
    $region8: #{tpu_custom_call.1} parent=1 // pred_region
      %40 = vsyncadd [#allocation3], 0
      %s42 = sshll.u32 %s1, 4
      %s43 = int_to_ptr.hbm [resolvable:$true] %s42
      %s44 = sshll.u32 [#allocation2], 4
      %s45 = int_to_ptr.vmem [resolvable:$true] %s44
      %47 = dma.hbm_to_vmem [thread:$0]  %s43, 16, %s45, [#allocation3]
    $region9: #{tpu_custom_call.1} parent=1 // pred_fallthru
      _
    // Predicated region
    $region10: #{tpu_custom_call.1} parent=1 // pred_check
      _
    $region11: #{tpu_custom_call.1} parent=1 // pred_check_branch
      %49 = sbr.rel (0) target = $region13
    $region12: #{tpu_custom_call.1} parent=1 // pred_region
      %51 = vsyncadd [#allocation6], 0
      %s52 = sshll.u32 %s2, 4
      %s53 = int_to_ptr.hbm [resolvable:$true] %s52
      %s54 = sshll.u32 [#allocation5], 4
      %s55 = int_to_ptr.vmem [resolvable:$true] %s54
      %60 = dma.hbm_to_vmem [thread:$0]  %s53, 128, %s55, [#allocation6], 64, 64, 4
    $region13: #{tpu_custom_call.1} parent=1 // pred_fallthru
      _
    // Predicated region
    $region14: #{tpu_custom_call.1} parent=1 // pred_check
      _
    $region15: #{tpu_custom_call.1} parent=1 // pred_check_branch
      %62 = sbr.rel (0) target = $region17
    $region16: #{tpu_custom_call.1} parent=1 // pred_region
      %64 = vsyncadd [#allocation6], 0
      %s65 = sshll.u32 %s3, 4
      %s66 = int_to_ptr.hbm [resolvable:$true] %s65
      %s67 = sshll.u32 [#allocation7], 4
      %s68 = int_to_ptr.vmem [resolvable:$true] %s67
      %73 = dma.hbm_to_vmem [thread:$0]  %s66, 192, %s68, [#allocation6], 64, 64, 4
    $region17: #{tpu_custom_call.1} parent=1 // pred_fallthru
      _
    // Predicated region
    $region18: #{tpu_custom_call.1} parent=1 // pred_check
      _
    $region19: #{tpu_custom_call.1} parent=1 // pred_check_branch
      %75 = sbr.rel (0) target = $region21
    $region20: #{tpu_custom_call.1} parent=1 // pred_region
      %77 = vsyncadd [#allocation9], 0
      %s78 = sshll.u32 %s4, 4
      %s79 = int_to_ptr.hbm [resolvable:$true] %s78
      %s80 = sshll.u32 [#allocation8], 4
      %s81 = int_to_ptr.vmem [resolvable:$true] %s80
      %86 = dma.hbm_to_vmem [thread:$0]  %s79, 1024, %s81, [#allocation9], 64, 64, 4
    $region21: #{tpu_custom_call.1} parent=1 // pred_fallthru
      _
    // Predicated region
    $region22: #{tpu_custom_call.1} parent=1 // pred_check
      _
    $region23: #{tpu_custom_call.1} parent=1 // pred_check_branch
      %88 = sbr.rel (0) target = $region25
    $region24: #{tpu_custom_call.1} parent=1 // pred_region
      %90 = vsyncadd [#allocation9], 0
      %s91 = sshll.u32 %s5, 4
      %s92 = int_to_ptr.hbm [resolvable:$true] %s91
      %s93 = sshll.u32 [#allocation10], 4
      %s94 = int_to_ptr.vmem [resolvable:$true] %s93
      %99 = dma.hbm_to_vmem [thread:$0]  %s92, 1024, %s94, [#allocation9], 64, 64, 4
    $region25: #{tpu_custom_call.1} parent=1 // pred_fallthru
      _
    // Predicated region
    $region26: #{tpu_custom_call.1} parent=1 // pred_check
      _
    $region27: #{tpu_custom_call.1} parent=1 // pred_check_branch
      %101 = sbr.rel (0) target = $region29
    $region28: #{tpu_custom_call.1} parent=1 // pred_region
      %103 = vsyncadd [#allocation12], 0
      %s104 = sshll.u32 %s6, 4
      %s105 = int_to_ptr.hbm [resolvable:$true] %s104
      %s106 = sshll.u32 [#allocation11], 4
      %s107 = int_to_ptr.vmem [resolvable:$true] %s106
      %112 = dma.hbm_to_vmem [thread:$0]  %s105, 1024, %s107, [#allocation12], 64, 64, 4
    $region29: #{tpu_custom_call.1} parent=1 // pred_fallthru
      _
    // Predicated region
    $region30: #{tpu_custom_call.1} parent=1 // pred_check
      _
    $region31: #{tpu_custom_call.1} parent=1 // pred_check_branch
      %114 = sbr.rel (0) target = $region33
    $region32: #{tpu_custom_call.1} parent=1 // pred_region
      %116 = vsyncadd [#allocation12], 0
      %s118 = sshll.u32 %s7, 4
      %s119 = int_to_ptr.hbm [resolvable:$true] %s118
      %s120 = sshll.u32 [#allocation13], 4
      %s121 = int_to_ptr.vmem [resolvable:$true] %s120
      %123 = dma.hbm_to_vmem [thread:$0]  %s119, 16, %s121, [#allocation12]
    $region33: #{tpu_custom_call.1} parent=1 // pred_fallthru
      _
    // Predicated region
    $region34: #{tpu_custom_call.1} parent=1 // pred_check
      _
    $region35: #{tpu_custom_call.1} parent=1 // pred_check_branch
      %125 = sbr.rel (0) target = $region37
    $region36: #{tpu_custom_call.1} parent=1 // pred_region
      %127 = vsyncadd [#allocation15], 0
      %s128 = sshll.u32 %s8, 4
      %s129 = int_to_ptr.hbm [resolvable:$true] %s128
      %s130 = sshll.u32 [#allocation14], 4
      %s131 = int_to_ptr.vmem [resolvable:$true] %s130
      %136 = dma.hbm_to_vmem [thread:$0]  %s129, 1024, %s131, [#allocation15], 64, 64, 4
    $region37: #{tpu_custom_call.1} parent=1 // pred_fallthru
      _
    // Predicated region
    $region38: #{tpu_custom_call.1} parent=1 // pred_check
      _
    $region39: #{tpu_custom_call.1} parent=1 // pred_check_branch
      %138 = sbr.rel (0) target = $region41
    $region40: #{tpu_custom_call.1} parent=1 // pred_region
      %140 = vsyncadd [#allocation15], 0
      %s141 = sshll.u32 %s9, 4
      %s142 = int_to_ptr.hbm [resolvable:$true] %s141
      %s143 = sshll.u32 [#allocation16], 4
      %s144 = int_to_ptr.vmem [resolvable:$true] %s143
      %149 = dma.hbm_to_vmem [thread:$0]  %s142, 1024, %s144, [#allocation15], 64, 64, 4
    $region41: #{tpu_custom_call.1} parent=1 // pred_fallthru
      _
    // Predicated region
    $region42: #{tpu_custom_call.1} parent=1 // pred_check
      _
    $region43: #{tpu_custom_call.1} parent=1 // pred_check_branch
      %151 = sbr.rel (0) target = $region45
    $region44: #{tpu_custom_call.1} parent=1 // pred_region
      %153 = vsyncadd [#allocation18], 0
      %s154 = sshll.u32 %s10, 4
      %s155 = int_to_ptr.hbm [resolvable:$true] %s154
      %s156 = sshll.u32 [#allocation17], 4
      %s157 = int_to_ptr.vmem [resolvable:$true] %s156
      %162 = dma.hbm_to_vmem [thread:$0]  %s155, 1024, %s157, [#allocation18], 64, 64, 4
    $region45: #{tpu_custom_call.1} parent=1 // pred_fallthru
      _
    // Predicated region
    $region46: #{tpu_custom_call.1} parent=1 // pred_check
      _
    $region47: #{tpu_custom_call.1} parent=1 // pred_check_branch
      %164 = sbr.rel (0) target = $region49
    $region48: #{tpu_custom_call.1} parent=1 // pred_region
      %166 = vsyncadd [#allocation18], 0
      %s168 = sshll.u32 %s11, 4
      %s169 = int_to_ptr.hbm [resolvable:$true] %s168
      %s170 = sshll.u32 [#allocation19], 4
      %s171 = int_to_ptr.vmem [resolvable:$true] %s170
      %173 = dma.hbm_to_vmem [thread:$0]  %s169, 16, %s171, [#allocation18]
    $region49: #{tpu_custom_call.1} parent=1 // pred_fallthru
      _
    // Predicated region
    $region50: #{tpu_custom_call.1} parent=1 // pred_check
      _
    $region51: #{tpu_custom_call.1} parent=1 // pred_check_branch
      %175 = sbr.rel (0) target = $region53
    $region52: #{tpu_custom_call.1} parent=1 // pred_region
      %177 = vsyncadd [#allocation21], 0
      %s179 = sshll.u32 %s12, 4
      %s180 = int_to_ptr.hbm [resolvable:$true] %s179
      %s181 = sshll.u32 [#allocation20], 4
      %s182 = int_to_ptr.vmem [resolvable:$true] %s181
      %184 = dma.hbm_to_vmem [thread:$0]  %s180, 16, %s182, [#allocation21]
    $region53: #{tpu_custom_call.1} parent=1 // pred_fallthru
      _
    // Predicated region
    $region54: #{tpu_custom_call.1} parent=1 // pred_check
      _
    $region55: #{tpu_custom_call.1} parent=1 // pred_check_branch
      %186 = sbr.rel (0) target = $region57
    $region56: #{tpu_custom_call.1} parent=1 // pred_region
      %188 = vsyncadd [#allocation21], 0
      %s190 = sshll.u32 %s13, 4
      %s191 = int_to_ptr.hbm [resolvable:$true] %s190
      %s192 = sshll.u32 [#allocation22], 4
      %s193 = int_to_ptr.vmem [resolvable:$true] %s192
      %195 = dma.hbm_to_vmem [thread:$0]  %s191, 16, %s193, [#allocation21]
    $region57: #{tpu_custom_call.1} parent=1 // pred_fallthru
      _
    // Predicated region
    $region58: #{tpu_custom_call.1} parent=1 // pred_check
      _
    $region59: #{tpu_custom_call.1} parent=1 // pred_check_branch
      %197 = sbr.rel (0) target = $region61
    $region60: #{tpu_custom_call.1} parent=1 // pred_region
      %199 = vsyncadd [#allocation24], 0
      %s200 = sshll.u32 %s14, 4
      %s201 = int_to_ptr.hbm [resolvable:$true] %s200
      %s202 = sshll.u32 [#allocation23], 4
      %s203 = int_to_ptr.vmem [resolvable:$true] %s202
      %208 = dma.hbm_to_vmem [thread:$0]  %s201, 1024, %s203, [#allocation24], 64, 64, 4
    $region61: #{tpu_custom_call.1} parent=1 // pred_fallthru
      _
    // Predicated region
    $region62: #{tpu_custom_call.1} parent=1 // pred_check
      _
    $region63: #{tpu_custom_call.1} parent=1 // pred_check_branch
      %210 = sbr.rel (0) target = $region65
    $region64: #{tpu_custom_call.1} parent=1 // pred_region
      %212 = vsyncadd [#allocation24], 0
      %s214 = sshll.u32 %s15, 4
      %s215 = int_to_ptr.hbm [resolvable:$true] %s214
      %s216 = sshll.u32 [#allocation25], 4
      %s217 = int_to_ptr.vmem [resolvable:$true] %s216
      %219 = dma.hbm_to_vmem [thread:$0]  %s215, 16, %s217, [#allocation24]
    $region65: #{tpu_custom_call.1} parent=1 // pred_fallthru
      _
    // Predicated region
    $region66: #{tpu_custom_call.1} parent=1 // pred_check
      _
    $region67: #{tpu_custom_call.1} parent=1 // pred_check_branch
      %221 = sbr.rel (0) target = $region69
    $region68: #{tpu_custom_call.1} parent=1 // pred_region
      _
    $region69: #{tpu_custom_call.1} parent=1 // pred_fallthru
      _
    // Predicated region
    $region70: #{tpu_custom_call.1} parent=1 // pred_check
      _
    $region71: #{tpu_custom_call.1} parent=1 // pred_check_branch
      %223 = sbr.rel (0) target = $region73
    $region72: #{tpu_custom_call.1} parent=1 // pred_region
      _
    $region73: #{tpu_custom_call.1} parent=1 // pred_fallthru
      _
    // Predicated region
    $region74: #{tpu_custom_call.1} parent=1 // pred_check
      _
    $region75: #{tpu_custom_call.1} parent=1 // pred_check_branch
      %225 = sbr.rel (0) target = $region77
    $region76: #{tpu_custom_call.1} parent=1 // pred_region
      %227 = dma.done [#allocation3], 16
    $region77: #{tpu_custom_call.1} parent=1 // pred_fallthru
      _
    // Predicated region
    $region78: #{tpu_custom_call.1} parent=1 // pred_check
      _
    $region79: #{tpu_custom_call.1} parent=1 // pred_check_branch
      %229 = sbr.rel (0) target = $region81
    $region80: #{tpu_custom_call.1} parent=1 // pred_region
      %231 = dma.done [#allocation6], 128
    $region81: #{tpu_custom_call.1} parent=1 // pred_fallthru
      _
    // Predicated region
    $region82: #{tpu_custom_call.1} parent=1 // pred_check
      _
    $region83: #{tpu_custom_call.1} parent=1 // pred_check_branch
      %233 = sbr.rel (0) target = $region85
    $region84: #{tpu_custom_call.1} parent=1 // pred_region
      %235 = dma.done [#allocation6], 192
    $region85: #{tpu_custom_call.1} parent=1 // pred_fallthru
      _
    // Predicated region
    $region86: #{tpu_custom_call.1} parent=1 // pred_check
      _
    $region87: #{tpu_custom_call.1} parent=1 // pred_check_branch
      %237 = sbr.rel (0) target = $region89
    $region88: #{tpu_custom_call.1} parent=1 // pred_region
      %239 = dma.done [#allocation9], 1024
    $region89: #{tpu_custom_call.1} parent=1 // pred_fallthru
      _
    // Predicated region
    $region90: #{tpu_custom_call.1} parent=1 // pred_check
      _
    $region91: #{tpu_custom_call.1} parent=1 // pred_check_branch
      %241 = sbr.rel (0) target = $region93
    $region92: #{tpu_custom_call.1} parent=1 // pred_region
      %243 = dma.done [#allocation9], 1024
    $region93: #{tpu_custom_call.1} parent=1 // pred_fallthru
      _
    // Predicated region
    $region94: #{tpu_custom_call.1} parent=1 // pred_check
      _
    $region95: #{tpu_custom_call.1} parent=1 // pred_check_branch
      %245 = sbr.rel (0) target = $region97
    $region96: #{tpu_custom_call.1} parent=1 // pred_region
      %247 = dma.done [#allocation12], 1024
    $region97: #{tpu_custom_call.1} parent=1 // pred_fallthru
      _
    // Predicated region
    $region98: #{tpu_custom_call.1} parent=1 // pred_check
      _
    $region99: #{tpu_custom_call.1} parent=1 // pred_check_branch
      %249 = sbr.rel (0) target = $region101
    $region100: #{tpu_custom_call.1} parent=1 // pred_region
      %251 = dma.done [#allocation12], 16
    $region101: #{tpu_custom_call.1} parent=1 // pred_fallthru
      _
    // Predicated region
    $region102: #{tpu_custom_call.1} parent=1 // pred_check
      _
    $region103: #{tpu_custom_call.1} parent=1 // pred_check_branch
      %253 = sbr.rel (0) target = $region105
    $region104: #{tpu_custom_call.1} parent=1 // pred_region
      %255 = dma.done [#allocation15], 1024
    $region105: #{tpu_custom_call.1} parent=1 // pred_fallthru
      _
    // Predicated region
    $region106: #{tpu_custom_call.1} parent=1 // pred_check
      _
    $region107: #{tpu_custom_call.1} parent=1 // pred_check_branch
      %257 = sbr.rel (0) target = $region109
    $region108: #{tpu_custom_call.1} parent=1 // pred_region
      %259 = dma.done [#allocation15], 1024
    $region109: #{tpu_custom_call.1} parent=1 // pred_fallthru
      _
    // Predicated region
    $region110: #{tpu_custom_call.1} parent=1 // pred_check
      _
    $region111: #{tpu_custom_call.1} parent=1 // pred_check_branch
      %261 = sbr.rel (0) target = $region113
    $region112: #{tpu_custom_call.1} parent=1 // pred_region
      %263 = dma.done [#allocation18], 1024
    $region113: #{tpu_custom_call.1} parent=1 // pred_fallthru
      _
    // Predicated region
    $region114: #{tpu_custom_call.1} parent=1 // pred_check
      _
    $region115: #{tpu_custom_call.1} parent=1 // pred_check_branch
      %265 = sbr.rel (0) target = $region117
    $region116: #{tpu_custom_call.1} parent=1 // pred_region
      %267 = dma.done [#allocation18], 16
    $region117: #{tpu_custom_call.1} parent=1 // pred_fallthru
      _
    // Predicated region
    $region118: #{tpu_custom_call.1} parent=1 // pred_check
      _
    $region119: #{tpu_custom_call.1} parent=1 // pred_check_branch
      %269 = sbr.rel (0) target = $region121
    $region120: #{tpu_custom_call.1} parent=1 // pred_region
      %271 = dma.done [#allocation21], 16
    $region121: #{tpu_custom_call.1} parent=1 // pred_fallthru
      _
    // Predicated region
    $region122: #{tpu_custom_call.1} parent=1 // pred_check
      _
    $region123: #{tpu_custom_call.1} parent=1 // pred_check_branch
      %273 = sbr.rel (0) target = $region125
    $region124: #{tpu_custom_call.1} parent=1 // pred_region
      %275 = dma.done [#allocation21], 16
    $region125: #{tpu_custom_call.1} parent=1 // pred_fallthru
      _
    // Predicated region
    $region126: #{tpu_custom_call.1} parent=1 // pred_check
      _
    $region127: #{tpu_custom_call.1} parent=1 // pred_check_branch
      %277 = sbr.rel (0) target = $region129
    $region128: #{tpu_custom_call.1} parent=1 // pred_region
      %279 = dma.done [#allocation24], 1024
    $region129: #{tpu_custom_call.1} parent=1 // pred_fallthru
      _
    // Predicated region
    $region130: #{tpu_custom_call.1} parent=1 // pred_check
      _
    $region131: #{tpu_custom_call.1} parent=1 // pred_check_branch
      %281 = sbr.rel (0) target = $region133
    $region132: #{tpu_custom_call.1} parent=1 // pred_region
      %283 = dma.done [#allocation24], 16
    $region133: #{tpu_custom_call.1} parent=1 // pred_fallthru
      _
    %v285 = vld [vmem:[%s0] sm:$0xff]
    %v286 = vld [vmem:[%s0 + $0x8] sm:$0xff]
    %v287 = vld [vmem:[%s0 + $0x10] sm:$0xff]
    %v288 = vld [vmem:[%s0 + $0x18] sm:$0xff]
    %v289 = vld [vmem:[%s0 + $0x20] sm:$0xff]
    %v290 = vld [vmem:[%s0 + $0x28] sm:$0xff]
    %v291 = vld [vmem:[#allocation2] sm:$0x1]
    %v292 = vlaneseq
    %v293 = vand.u32 %v292, 127
    %294 = vset.pattern.permute.xlu0 0
    %295 = vperm.xlu0 %294, %v285
    %v296 = vpop.permute.xlu0 %295
    %297 = vset.pattern.permute.xlu0 0
    %298 = vperm.xlu0 %297, %v286
    %v299 = vpop.permute.xlu0 %298
    %300 = vset.pattern.permute.xlu0 0
    %301 = vperm.xlu0 %300, %v287
    %v302 = vpop.permute.xlu0 %301
    %303 = vset.pattern.permute.xlu0 0
    %304 = vperm.xlu0 %303, %v288
    %v305 = vpop.permute.xlu0 %304
    %306 = vset.pattern.permute.xlu0 0
    %307 = vperm.xlu0 %306, %v289
    %v308 = vpop.permute.xlu0 %307
    %309 = vset.pattern.permute.xlu0 0
    %310 = vperm.xlu0 %309, %v290
    %v311 = vpop.permute.xlu0 %310
    %vm312 = vcmp.eq.s32.totalorder %v293, %v296
    %vm313 = vcmp.eq.s32.totalorder %v293, %v299
    %vm314 = vcmp.eq.s32.totalorder %v293, %v302
    %vm315 = vcmp.eq.s32.totalorder %v293, %v305
    %vm316 = vcmp.eq.s32.totalorder %v293, %v308
    %vm317 = vcmp.eq.s32.totalorder %v293, %v311
    %v318 = vsel %vm312, 1, 0
    %v319 = vsel %vm313, 1, 0
    %v320 = vsel %vm314, 1, 0
    %v321 = vsel %vm315, 1, 0
    %v322 = vsel %vm316, 1, 0
    %v323 = vsel %vm317, 1, 0
    %v324 = vcvt.s32.f32 %v318
    %v325 = vcvt.s32.f32 %v319
    %v326 = vcvt.s32.f32 %v320
    %v327 = vcvt.s32.f32 %v321
    %v328 = vcvt.s32.f32 %v322
    %v329 = vcvt.s32.f32 %v323
    %v330 = vpack.c.bf16 %v325, %v324
    %v331 = vpack.c.bf16 %v327, %v326
    %v332 = vpack.c.bf16 %v329, %v328
    %v333 = vlaneseq
    %v334 = vshrl.u32 %v333, 7
    %v335 = vadd.s32 %v334, 8
    %v336 = vperm.slane %v291, 0
    %vm337 = vcmp.eq.s32.totalorder %v334, %v336
    %vm338 = vcmp.eq.s32.totalorder %v335, %v336
    %v339 = vsel %vm337, 1, 0
    %v340 = vsel %vm338, 1, 0
    %v341 = vcvt.s32.f32 %v339
    %v342 = vcvt.s32.f32 %v340
    %v343 = vpack.c.bf16 %v342, %v341
    %v344 = vld [vmem:[#allocation5] sm:$0xf]
    %v345 = vld [vmem:[#allocation5 + $0x4] sm:$0xf]
    %v348 = vunpack.c.l.b16 %v344
    %v349 = vunpack.c.l.b16 %v345
    %v350 = vpack.c.b16 %v349, %v348
    %vm352 = vcmask 130048
    %v354 = vsel %vm352, %v330, 0
    %v357 = vsel %vm352, %v331, 0
    %v360 = vsel %vm352, %v332, 0
    %362 = vmatpush.bf16.msra.mxu0 0
    %363 = vmatpush.bf16.msra.mxu0 0
    %364 = vmatpush.bf16.msra.mxu0 0
    %365 = vmatpush.bf16.msra.mxu0 0
    %366 = vmatpush.bf16.msra.mxu0 0
    %367 = vmatpush.bf16.msra.mxu0 0
    %368 = vmatpush.bf16.msra.mxu0 0
    %369 = vmatpush.bf16.msra.mxu0 %v350
    %370 = vmatmul.bf16.gmra.mxu0 %v354
    %v371 = vpop.f32.mrf.mxu0
    %v372 = vadd.f32 0.0, %v371
    %v373 = vpop.f32.mrf.mxu0
    %v374 = vadd.f32 0.0, %v373
    %375 = vmatmul.bf16.gmra.mxu0 %v357
    %v376 = vpop.f32.mrf.mxu0
    %v377 = vadd.f32 0.0, %v376
    %v378 = vpop.f32.mrf.mxu0
    %v379 = vadd.f32 0.0, %v378
    %380 = vmatmul.bf16.gmra.mxu0 %v360
    %v381 = vpop.f32.mrf.mxu0
    %v382 = vadd.f32 0.0, %v381
    %v383 = vpop.f32.mrf.mxu0
    %v384 = vadd.f32 0.0, %v383
    %385 = vdwg.mxu0
    %v386 = vpack.c.bf16 %v374, %v372
    %v387 = vpack.c.bf16 %v377, %v377
    %v388 = vpack.c.bf16 %v382, %v379
    %v389 = vpack.c.bf16 %v384, %v384
    %v390 = vld [vmem:[#allocation8] sm:$0xf]
    %v391 = vld [vmem:[#allocation8 + $0x4] sm:$0xf]
    %v392 = vld [vmem:[#allocation8 + $0x8] sm:$0xf]
    %v393 = vld [vmem:[#allocation8 + $0xc] sm:$0xf]
    %v394 = vld [vmem:[#allocation8 + $0x10] sm:$0xf]
    %v395 = vld [vmem:[#allocation8 + $0x14] sm:$0xf]
    %v396 = vld [vmem:[#allocation8 + $0x18] sm:$0xf]
    %v397 = vld [vmem:[#allocation8 + $0x1c] sm:$0xf]
    %v398 = vld [vmem:[#allocation8 + $0x20] sm:$0xf]
    %v399 = vld [vmem:[#allocation8 + $0x24] sm:$0xf]
    %v400 = vld [vmem:[#allocation8 + $0x28] sm:$0xf]
    %v401 = vld [vmem:[#allocation8 + $0x2c] sm:$0xf]
    %v402 = vld [vmem:[#allocation8 + $0x30] sm:$0xf]
    %v403 = vld [vmem:[#allocation8 + $0x34] sm:$0xf]
    %v404 = vld [vmem:[#allocation8 + $0x38] sm:$0xf]
    %v405 = vld [vmem:[#allocation8 + $0x3c] sm:$0xf]
    %v406 = vld [vmem:[#allocation7] sm:$0xf]
    %v407 = vld [vmem:[#allocation7 + $0x4] sm:$0xf]
    %v408 = vld [vmem:[#allocation7 + $0x8] sm:$0xf]
    %v409 = vld [vmem:[#allocation10] sm:$0xf]
    %v410 = vld [vmem:[#allocation10 + $0x4] sm:$0xf]
    %v411 = vld [vmem:[#allocation10 + $0x8] sm:$0xf]
    %v412 = vld [vmem:[#allocation10 + $0xc] sm:$0xf]
    %v413 = vld [vmem:[#allocation10 + $0x10] sm:$0xf]
    %v414 = vld [vmem:[#allocation10 + $0x14] sm:$0xf]
    %v415 = vld [vmem:[#allocation10 + $0x18] sm:$0xf]
    %v416 = vld [vmem:[#allocation10 + $0x1c] sm:$0xf]
    %v417 = vld [vmem:[#allocation10 + $0x20] sm:$0xf]
    %v418 = vld [vmem:[#allocation10 + $0x24] sm:$0xf]
    %v419 = vld [vmem:[#allocation10 + $0x28] sm:$0xf]
    %v420 = vld [vmem:[#allocation10 + $0x2c] sm:$0xf]
    %v421 = vld [vmem:[#allocation10 + $0x30] sm:$0xf]
    %v422 = vld [vmem:[#allocation10 + $0x34] sm:$0xf]
    %v423 = vld [vmem:[#allocation10 + $0x38] sm:$0xf]
    %v424 = vld [vmem:[#allocation10 + $0x3c] sm:$0xf]
    %v428 = vunpack.c.l.b16 %v406
    %v429 = vunpack.c.l.b16 %v407
    %v430 = vunpack.c.l.b16 %v408
    %v431 = vpack.c.b16 %v429, %v428
    %v432 = vpack.c.b16 %v430, %v430
    %v451 = vunpack.c.l.b16 %v409
    %v452 = vunpack.c.l.b16 %v410
    %v453 = vunpack.c.l.b16 %v411
    %v454 = vunpack.c.l.b16 %v412
    %v455 = vunpack.c.l.b16 %v413
    %v456 = vunpack.c.l.b16 %v414
    %v457 = vunpack.c.l.b16 %v415
    %v458 = vunpack.c.l.b16 %v416
    %v459 = vunpack.c.l.b16 %v417
    %v460 = vunpack.c.l.b16 %v418
    %v461 = vunpack.c.l.b16 %v419
    %v462 = vunpack.c.l.b16 %v420
    %v463 = vunpack.c.l.b16 %v421
    %v464 = vunpack.c.l.b16 %v422
    %v465 = vunpack.c.l.b16 %v423
    %v466 = vunpack.c.l.b16 %v424
    %v467 = vpack.c.b16 %v452, %v451
    %v468 = vpack.c.b16 %v454, %v453
    %v469 = vpack.c.b16 %v456, %v455
    %v470 = vpack.c.b16 %v458, %v457
    %v471 = vpack.c.b16 %v460, %v459
    %v472 = vpack.c.b16 %v462, %v461
    %v473 = vpack.c.b16 %v464, %v463
    %v474 = vpack.c.b16 %v466, %v465
    %483 = vmatpush.bf16.msra.mxu0 %v474
    %484 = vmatpush.bf16.msra.mxu0 %v473
    %485 = vmatpush.bf16.msra.mxu0 %v472
    %486 = vmatpush.bf16.msra.mxu0 %v471
    %487 = vmatpush.bf16.msra.mxu0 %v470
    %488 = vmatpush.bf16.msra.mxu0 %v469
    %489 = vmatpush.bf16.msra.mxu0 %v468
    %490 = vmatpush.bf16.msra.mxu0 %v467
    %491 = vmatmul.bf16.gmra.mxu0 %v431
    %v492 = vpop.f32.mrf.mxu0
    %v493 = vadd.f32 0.0, %v492
    %v494 = vpop.f32.mrf.mxu0
    %v495 = vadd.f32 0.0, %v494
    %496 = vmatmul.bf16.gmra.mxu0 %v432
    %v497 = vpop.f32.mrf.mxu0
    %v498 = vadd.f32 0.0, %v497
    %v499 = vpop.f32.mrf.mxu0
    %500 = vdwg.mxu0
    %v517 = vunpack.c.l.b16 %v390
    %v518 = vunpack.c.l.b16 %v391
    %v519 = vunpack.c.l.b16 %v392
    %v520 = vunpack.c.l.b16 %v393
    %v521 = vunpack.c.l.b16 %v394
    %v522 = vunpack.c.l.b16 %v395
    %v523 = vunpack.c.l.b16 %v396
    %v524 = vunpack.c.l.b16 %v397
    %v525 = vunpack.c.l.b16 %v398
    %v526 = vunpack.c.l.b16 %v399
    %v527 = vunpack.c.l.b16 %v400
    %v528 = vunpack.c.l.b16 %v401
    %v529 = vunpack.c.l.b16 %v402
    %v530 = vunpack.c.l.b16 %v403
    %v531 = vunpack.c.l.b16 %v404
    %v532 = vunpack.c.l.b16 %v405
    %v533 = vpack.c.b16 %v518, %v517
    %v534 = vpack.c.b16 %v520, %v519
    %v535 = vpack.c.b16 %v522, %v521
    %v536 = vpack.c.b16 %v524, %v523
    %v537 = vpack.c.b16 %v526, %v525
    %v538 = vpack.c.b16 %v528, %v527
    %v539 = vpack.c.b16 %v530, %v529
    %v540 = vpack.c.b16 %v532, %v531
    %549 = vmatpush.bf16.msra.mxu0 %v540
    %550 = vmatpush.bf16.msra.mxu0 %v539
    %551 = vmatpush.bf16.msra.mxu0 %v538
    %552 = vmatpush.bf16.msra.mxu0 %v537
    %553 = vmatpush.bf16.msra.mxu0 %v536
    %554 = vmatpush.bf16.msra.mxu0 %v535
    %555 = vmatpush.bf16.msra.mxu0 %v534
    %556 = vmatpush.bf16.msra.mxu0 %v533
    %557 = vmatmul.bf16.gmra.mxu0 %v386
    %v558 = vpop.f32.mrf.mxu0
    %v559 = vadd.f32 %v493, %v558
    %v560 = vpop.f32.mrf.mxu0
    %v561 = vadd.f32 %v495, %v560
    %562 = vmatmul.bf16.gmra.mxu0 %v387
    %v563 = vpop.f32.mrf.mxu0
    %v564 = vadd.f32 %v498, %v563
    %v565 = vpop.f32.mrf.mxu0
    %566 = vdwg.mxu0
    %v567 = vld [vmem:[#allocation11] sm:$0xf]
    %v568 = vld [vmem:[#allocation11 + $0x4] sm:$0xf]
    %v569 = vld [vmem:[#allocation11 + $0x8] sm:$0xf]
    %v570 = vld [vmem:[#allocation11 + $0xc] sm:$0xf]
    %v571 = vld [vmem:[#allocation11 + $0x10] sm:$0xf]
    %v572 = vld [vmem:[#allocation11 + $0x14] sm:$0xf]
    %v573 = vld [vmem:[#allocation11 + $0x18] sm:$0xf]
    %v574 = vld [vmem:[#allocation11 + $0x1c] sm:$0xf]
    %v575 = vld [vmem:[#allocation11 + $0x20] sm:$0xf]
    %v576 = vld [vmem:[#allocation11 + $0x24] sm:$0xf]
    %v577 = vld [vmem:[#allocation11 + $0x28] sm:$0xf]
    %v578 = vld [vmem:[#allocation11 + $0x2c] sm:$0xf]
    %v579 = vld [vmem:[#allocation11 + $0x30] sm:$0xf]
    %v580 = vld [vmem:[#allocation11 + $0x34] sm:$0xf]
    %v581 = vld [vmem:[#allocation11 + $0x38] sm:$0xf]
    %v582 = vld [vmem:[#allocation11 + $0x3c] sm:$0xf]
    %v599 = vunpack.c.l.b16 %v567
    %v600 = vunpack.c.l.b16 %v568
    %v601 = vunpack.c.l.b16 %v569
    %v602 = vunpack.c.l.b16 %v570
    %v603 = vunpack.c.l.b16 %v571
    %v604 = vunpack.c.l.b16 %v572
    %v605 = vunpack.c.l.b16 %v573
    %v606 = vunpack.c.l.b16 %v574
    %v607 = vunpack.c.l.b16 %v575
    %v608 = vunpack.c.l.b16 %v576
    %v609 = vunpack.c.l.b16 %v577
    %v610 = vunpack.c.l.b16 %v578
    %v611 = vunpack.c.l.b16 %v579
    %v612 = vunpack.c.l.b16 %v580
    %v613 = vunpack.c.l.b16 %v581
    %v614 = vunpack.c.l.b16 %v582
    %v615 = vpack.c.b16 %v600, %v599
    %v616 = vpack.c.b16 %v602, %v601
    %v617 = vpack.c.b16 %v604, %v603
    %v618 = vpack.c.b16 %v606, %v605
    %v619 = vpack.c.b16 %v608, %v607
    %v620 = vpack.c.b16 %v610, %v609
    %v621 = vpack.c.b16 %v612, %v611
    %v622 = vpack.c.b16 %v614, %v613
    %631 = vmatpush.bf16.msra.mxu0 %v622
    %632 = vmatpush.bf16.msra.mxu0 %v621
    %633 = vmatpush.bf16.msra.mxu0 %v620
    %634 = vmatpush.bf16.msra.mxu0 %v619
    %635 = vmatpush.bf16.msra.mxu0 %v618
    %636 = vmatpush.bf16.msra.mxu0 %v617
    %637 = vmatpush.bf16.msra.mxu0 %v616
    %638 = vmatpush.bf16.msra.mxu0 %v615
    %639 = vmatmul.bf16.gmra.mxu0 %v388
    %v640 = vpop.f32.mrf.mxu0
    %v641 = vadd.f32 0.0, %v640
    %v642 = vpop.f32.mrf.mxu0
    %v643 = vadd.f32 0.0, %v642
    %644 = vmatmul.bf16.gmra.mxu0 %v389
    %v645 = vpop.f32.mrf.mxu0
    %v646 = vadd.f32 0.0, %v645
    %v647 = vpop.f32.mrf.mxu0
    %648 = vdwg.mxu0
    %v649 = vadd.f32 %v559, %v641
    %v650 = vadd.f32 %v561, %v643
    %v651 = vadd.f32 %v564, %v646
    %v652 = vld [vmem:[#allocation13] sm:$0x1]
    %v654 = vperm.slane %v652, 0
    %v656 = vadd.f32 %v649, %v654
    %v657 = vadd.f32 %v650, %v654
    %v658 = vadd.f32 %v651, %v654
    %v659 = vmax.f32 %v656, 0.0
    %v660 = vmax.f32 %v657, 0.0
    %v661 = vmax.f32 %v658, 0.0
    %v662 = vpack.c.bf16 %v660, %v659
    %v663 = vpack.c.bf16 %v661, %v661
    %v664 = vld [vmem:[#allocation14] sm:$0xf]
    %v665 = vld [vmem:[#allocation14 + $0x4] sm:$0xf]
    %v666 = vld [vmem:[#allocation14 + $0x8] sm:$0xf]
    %v667 = vld [vmem:[#allocation14 + $0xc] sm:$0xf]
    %v668 = vld [vmem:[#allocation14 + $0x10] sm:$0xf]
    %v669 = vld [vmem:[#allocation14 + $0x14] sm:$0xf]
    %v670 = vld [vmem:[#allocation14 + $0x18] sm:$0xf]
    %v671 = vld [vmem:[#allocation14 + $0x1c] sm:$0xf]
    %v672 = vld [vmem:[#allocation14 + $0x20] sm:$0xf]
    %v673 = vld [vmem:[#allocation14 + $0x24] sm:$0xf]
    %v674 = vld [vmem:[#allocation14 + $0x28] sm:$0xf]
    %v675 = vld [vmem:[#allocation14 + $0x2c] sm:$0xf]
    %v676 = vld [vmem:[#allocation14 + $0x30] sm:$0xf]
    %v677 = vld [vmem:[#allocation14 + $0x34] sm:$0xf]
    %v678 = vld [vmem:[#allocation14 + $0x38] sm:$0xf]
    %v679 = vld [vmem:[#allocation14 + $0x3c] sm:$0xf]
    %v680 = vld [vmem:[#allocation19] sm:$0x1]
    %v682 = vperm.slane %v680, 0
    %v700 = vunpack.c.l.b16 %v664
    %v701 = vunpack.c.l.b16 %v665
    %v702 = vunpack.c.l.b16 %v666
    %v703 = vunpack.c.l.b16 %v667
    %v704 = vunpack.c.l.b16 %v668
    %v705 = vunpack.c.l.b16 %v669
    %v706 = vunpack.c.l.b16 %v670
    %v707 = vunpack.c.l.b16 %v671
    %v708 = vunpack.c.l.b16 %v672
    %v709 = vunpack.c.l.b16 %v673
    %v710 = vunpack.c.l.b16 %v674
    %v711 = vunpack.c.l.b16 %v675
    %v712 = vunpack.c.l.b16 %v676
    %v713 = vunpack.c.l.b16 %v677
    %v714 = vunpack.c.l.b16 %v678
    %v715 = vunpack.c.l.b16 %v679
    %v716 = vpack.c.b16 %v701, %v700
    %v717 = vpack.c.b16 %v703, %v702
    %v718 = vpack.c.b16 %v705, %v704
    %v719 = vpack.c.b16 %v707, %v706
    %v720 = vpack.c.b16 %v709, %v708
    %v721 = vpack.c.b16 %v711, %v710
    %v722 = vpack.c.b16 %v713, %v712
    %v723 = vpack.c.b16 %v715, %v714
    %732 = vmatpush.bf16.msra.mxu0 %v723
    %733 = vmatpush.bf16.msra.mxu0 %v722
    %734 = vmatpush.bf16.msra.mxu0 %v721
    %735 = vmatpush.bf16.msra.mxu0 %v720
    %736 = vmatpush.bf16.msra.mxu0 %v719
    %737 = vmatpush.bf16.msra.mxu0 %v718
    %738 = vmatpush.bf16.msra.mxu0 %v717
    %739 = vmatpush.bf16.msra.mxu0 %v716
    %740 = vmatmul.bf16.gmra.mxu0 %v662
    %v741 = vpop.f32.mrf.mxu0
    %v742 = vadd.f32 %v682, %v741
    %v743 = vpop.f32.mrf.mxu0
    %v744 = vadd.f32 %v682, %v743
    %745 = vmatmul.bf16.gmra.mxu0 %v663
    %v746 = vpop.f32.mrf.mxu0
    %v747 = vadd.f32 %v682, %v746
    %v748 = vpop.f32.mrf.mxu0
    %749 = vdwg.mxu0
    %v750 = vmax.f32 %v742, 0.0
    %v751 = vmax.f32 %v744, 0.0
    %v752 = vmax.f32 %v747, 0.0
    %v753 = vld [vmem:[#allocation16] sm:$0xf]
    %v754 = vld [vmem:[#allocation16 + $0x4] sm:$0xf]
    %v755 = vld [vmem:[#allocation16 + $0x8] sm:$0xf]
    %v756 = vld [vmem:[#allocation16 + $0xc] sm:$0xf]
    %v757 = vld [vmem:[#allocation16 + $0x10] sm:$0xf]
    %v758 = vld [vmem:[#allocation16 + $0x14] sm:$0xf]
    %v759 = vld [vmem:[#allocation16 + $0x18] sm:$0xf]
    %v760 = vld [vmem:[#allocation16 + $0x1c] sm:$0xf]
    %v761 = vld [vmem:[#allocation16 + $0x20] sm:$0xf]
    %v762 = vld [vmem:[#allocation16 + $0x24] sm:$0xf]
    %v763 = vld [vmem:[#allocation16 + $0x28] sm:$0xf]
    %v764 = vld [vmem:[#allocation16 + $0x2c] sm:$0xf]
    %v765 = vld [vmem:[#allocation16 + $0x30] sm:$0xf]
    %v766 = vld [vmem:[#allocation16 + $0x34] sm:$0xf]
    %v767 = vld [vmem:[#allocation16 + $0x38] sm:$0xf]
    %v768 = vld [vmem:[#allocation16 + $0x3c] sm:$0xf]
    %v769 = vld [vmem:[#allocation20] sm:$0x1]
    %v771 = vperm.slane %v769, 0
    %v789 = vunpack.c.l.b16 %v753
    %v790 = vunpack.c.l.b16 %v754
    %v791 = vunpack.c.l.b16 %v755
    %v792 = vunpack.c.l.b16 %v756
    %v793 = vunpack.c.l.b16 %v757
    %v794 = vunpack.c.l.b16 %v758
    %v795 = vunpack.c.l.b16 %v759
    %v796 = vunpack.c.l.b16 %v760
    %v797 = vunpack.c.l.b16 %v761
    %v798 = vunpack.c.l.b16 %v762
    %v799 = vunpack.c.l.b16 %v763
    %v800 = vunpack.c.l.b16 %v764
    %v801 = vunpack.c.l.b16 %v765
    %v802 = vunpack.c.l.b16 %v766
    %v803 = vunpack.c.l.b16 %v767
    %v804 = vunpack.c.l.b16 %v768
    %v805 = vpack.c.b16 %v790, %v789
    %v806 = vpack.c.b16 %v792, %v791
    %v807 = vpack.c.b16 %v794, %v793
    %v808 = vpack.c.b16 %v796, %v795
    %v809 = vpack.c.b16 %v798, %v797
    %v810 = vpack.c.b16 %v800, %v799
    %v811 = vpack.c.b16 %v802, %v801
    %v812 = vpack.c.b16 %v804, %v803
    %821 = vmatpush.bf16.msra.mxu0 %v812
    %822 = vmatpush.bf16.msra.mxu0 %v811
    %823 = vmatpush.bf16.msra.mxu0 %v810
    %824 = vmatpush.bf16.msra.mxu0 %v809
    %825 = vmatpush.bf16.msra.mxu0 %v808
    %826 = vmatpush.bf16.msra.mxu0 %v807
    %827 = vmatpush.bf16.msra.mxu0 %v806
    %828 = vmatpush.bf16.msra.mxu0 %v805
    %829 = vmatmul.bf16.gmra.mxu0 %v662
    %v830 = vpop.f32.mrf.mxu0
    %v831 = vadd.f32 %v771, %v830
    %v832 = vpop.f32.mrf.mxu0
    %v833 = vadd.f32 %v771, %v832
    %834 = vmatmul.bf16.gmra.mxu0 %v663
    %v835 = vpop.f32.mrf.mxu0
    %v836 = vadd.f32 %v771, %v835
    %v837 = vpop.f32.mrf.mxu0
    %838 = vdwg.mxu0
    %v839 = vmax.f32 %v831, 0.0
    %v840 = vmax.f32 %v833, 0.0
    %v841 = vmax.f32 %v836, 0.0
    %v842 = vld [vmem:[#allocation17] sm:$0xf]
    %v843 = vld [vmem:[#allocation17 + $0x4] sm:$0xf]
    %v844 = vld [vmem:[#allocation17 + $0x8] sm:$0xf]
    %v845 = vld [vmem:[#allocation17 + $0xc] sm:$0xf]
    %v846 = vld [vmem:[#allocation17 + $0x10] sm:$0xf]
    %v847 = vld [vmem:[#allocation17 + $0x14] sm:$0xf]
    %v848 = vld [vmem:[#allocation17 + $0x18] sm:$0xf]
    %v849 = vld [vmem:[#allocation17 + $0x1c] sm:$0xf]
    %v850 = vld [vmem:[#allocation17 + $0x20] sm:$0xf]
    %v851 = vld [vmem:[#allocation17 + $0x24] sm:$0xf]
    %v852 = vld [vmem:[#allocation17 + $0x28] sm:$0xf]
    %v853 = vld [vmem:[#allocation17 + $0x2c] sm:$0xf]
    %v854 = vld [vmem:[#allocation17 + $0x30] sm:$0xf]
    %v855 = vld [vmem:[#allocation17 + $0x34] sm:$0xf]
    %v856 = vld [vmem:[#allocation17 + $0x38] sm:$0xf]
    %v857 = vld [vmem:[#allocation17 + $0x3c] sm:$0xf]
    %v858 = vld [vmem:[#allocation22] sm:$0x1]
    %v860 = vperm.slane %v858, 0
    %v878 = vunpack.c.l.b16 %v842
    %v879 = vunpack.c.l.b16 %v843
    %v880 = vunpack.c.l.b16 %v844
    %v881 = vunpack.c.l.b16 %v845
    %v882 = vunpack.c.l.b16 %v846
    %v883 = vunpack.c.l.b16 %v847
    %v884 = vunpack.c.l.b16 %v848
    %v885 = vunpack.c.l.b16 %v849
    %v886 = vunpack.c.l.b16 %v850
    %v887 = vunpack.c.l.b16 %v851
    %v888 = vunpack.c.l.b16 %v852
    %v889 = vunpack.c.l.b16 %v853
    %v890 = vunpack.c.l.b16 %v854
    %v891 = vunpack.c.l.b16 %v855
    %v892 = vunpack.c.l.b16 %v856
    %v893 = vunpack.c.l.b16 %v857
    %v894 = vpack.c.b16 %v879, %v878
    %v895 = vpack.c.b16 %v881, %v880
    %v896 = vpack.c.b16 %v883, %v882
    %v897 = vpack.c.b16 %v885, %v884
    %v898 = vpack.c.b16 %v887, %v886
    %v899 = vpack.c.b16 %v889, %v888
    %v900 = vpack.c.b16 %v891, %v890
    %v901 = vpack.c.b16 %v893, %v892
    %910 = vmatpush.bf16.msra.mxu0 %v901
    %911 = vmatpush.bf16.msra.mxu0 %v900
    %912 = vmatpush.bf16.msra.mxu0 %v899
    %913 = vmatpush.bf16.msra.mxu0 %v898
    %914 = vmatpush.bf16.msra.mxu0 %v897
    %915 = vmatpush.bf16.msra.mxu0 %v896
    %916 = vmatpush.bf16.msra.mxu0 %v895
    %917 = vmatpush.bf16.msra.mxu0 %v894
    %918 = vmatmul.bf16.gmra.mxu0 %v662
    %v919 = vpop.f32.mrf.mxu0
    %v920 = vadd.f32 %v860, %v919
    %v921 = vpop.f32.mrf.mxu0
    %v922 = vadd.f32 %v860, %v921
    %923 = vmatmul.bf16.gmra.mxu0 %v663
    %v924 = vpop.f32.mrf.mxu0
    %v925 = vadd.f32 %v860, %v924
    %v926 = vpop.f32.mrf.mxu0
    %927 = vdwg.mxu0
    %v928 = vmax.f32 %v920, 0.0
    %v929 = vmax.f32 %v922, 0.0
    %v930 = vmax.f32 %v925, 0.0
    %v931 = vpack.c.bf16 %v751, %v750
    %v932 = vpack.c.bf16 %v928, %v752
    %v933 = vpack.c.bf16 %v930, %v929
    %vm934 = vcmask 392192
    %v936 = vsel %vm934, %v343, 0
    %938 = vmatpush.bf16.msra.mxu0 0
    %939 = vmatpush.bf16.msra.mxu0 0
    %940 = vmatpush.bf16.msra.mxu0 0
    %941 = vmatpush.bf16.msra.mxu0 0
    %942 = vmatpush.bf16.msra.mxu0 0
    %943 = vmatpush.bf16.msra.mxu0 %v933
    %944 = vmatpush.bf16.msra.mxu0 %v932
    %945 = vmatpush.bf16.msra.mxu0 %v931
    %946 = vmatmul.bf16.gmra.mxu0 %v936
    %v947 = vpop.f32.mrf.mxu0
    %v948 = vadd.f32 0.0, %v947
    %v949 = vpop.f32.mrf.mxu0
    %v950 = vadd.f32 0.0, %v949
    %951 = vdwg.mxu0
    %v952 = vsel %vm934, %v341, 0.0
    %953 = vadd.xlane.f32.xlu0 %v952
    %v954 = vpop.xlane.xlu0 %953
    %v955 = vsel %vm934, %v342, 0.0
    %956 = vadd.xlane.f32.xlu0 %v955
    %v957 = vpop.xlane.xlu0 %956
    %v958 = vmax.f32 %v954, 1.0
    %v959 = vmax.f32 %v957, 1.0
    %v960 = vrcp.pop %v958
    %v961 = vrcp.pop %v959
    %v962 = vmul.f32 %v948, %v960
    %v963 = vmul.f32 %v950, %v961
    %v964 = vpack.c.bf16 %v963, %v962
    %v965 = vld [vmem:[#allocation23] sm:$0xf]
    %v966 = vld [vmem:[#allocation23 + $0x4] sm:$0xf]
    %v967 = vld [vmem:[#allocation23 + $0x8] sm:$0xf]
    %v968 = vld [vmem:[#allocation23 + $0xc] sm:$0xf]
    %v969 = vld [vmem:[#allocation23 + $0x10] sm:$0xf]
    %v970 = vld [vmem:[#allocation23 + $0x14] sm:$0xf]
    %v971 = vld [vmem:[#allocation23 + $0x18] sm:$0xf]
    %v972 = vld [vmem:[#allocation23 + $0x1c] sm:$0xf]
    %v973 = vld [vmem:[#allocation23 + $0x20] sm:$0xf]
    %v974 = vld [vmem:[#allocation23 + $0x24] sm:$0xf]
    %v975 = vld [vmem:[#allocation23 + $0x28] sm:$0xf]
    %v976 = vld [vmem:[#allocation23 + $0x2c] sm:$0xf]
    %v977 = vld [vmem:[#allocation23 + $0x30] sm:$0xf]
    %v978 = vld [vmem:[#allocation23 + $0x34] sm:$0xf]
    %v979 = vld [vmem:[#allocation23 + $0x38] sm:$0xf]
    %v980 = vld [vmem:[#allocation23 + $0x3c] sm:$0xf]
    %v981 = vld [vmem:[#allocation25] sm:$0x1]
    %v983 = vperm.slane %v981, 0
    %v1001 = vunpack.c.l.b16 %v965
    %v1002 = vunpack.c.l.b16 %v966
    %v1003 = vunpack.c.l.b16 %v967
    %v1004 = vunpack.c.l.b16 %v968
    %v1005 = vunpack.c.l.b16 %v969
    %v1006 = vunpack.c.l.b16 %v970
    %v1007 = vunpack.c.l.b16 %v971
    %v1008 = vunpack.c.l.b16 %v972
    %v1009 = vunpack.c.l.b16 %v973
    %v1010 = vunpack.c.l.b16 %v974
    %v1011 = vunpack.c.l.b16 %v975
    %v1012 = vunpack.c.l.b16 %v976
    %v1013 = vunpack.c.l.b16 %v977
    %v1014 = vunpack.c.l.b16 %v978
    %v1015 = vunpack.c.l.b16 %v979
    %v1016 = vunpack.c.l.b16 %v980
    %v1017 = vpack.c.b16 %v1002, %v1001
    %v1018 = vpack.c.b16 %v1004, %v1003
    %v1019 = vpack.c.b16 %v1006, %v1005
    %v1020 = vpack.c.b16 %v1008, %v1007
    %v1021 = vpack.c.b16 %v1010, %v1009
    %v1022 = vpack.c.b16 %v1012, %v1011
    %v1023 = vpack.c.b16 %v1014, %v1013
    %v1024 = vpack.c.b16 %v1016, %v1015
    %1033 = vmatpush.bf16.msra.mxu0 %v1024
    %1034 = vmatpush.bf16.msra.mxu0 %v1023
    %1035 = vmatpush.bf16.msra.mxu0 %v1022
    %1036 = vmatpush.bf16.msra.mxu0 %v1021
    %1037 = vmatpush.bf16.msra.mxu0 %v1020
    %1038 = vmatpush.bf16.msra.mxu0 %v1019
    %1039 = vmatpush.bf16.msra.mxu0 %v1018
    %1040 = vmatpush.bf16.msra.mxu0 %v1017
    %1041 = vmatmul.bf16.gmra.mxu0 %v964
    %v1042 = vpop.f32.mrf.mxu0
    %v1043 = vadd.f32 %v983, %v1042
    %v1044 = vpop.f32.mrf.mxu0
    %v1045 = vadd.f32 %v983, %v1044
    %1046 = vdwg.mxu0
    %v1047 = vmax.f32 %v1043, 0.0
    %v1048 = vmax.f32 %v1045, 0.0
    %v1049 = vpack.c.bf16 %v1048, %v1047
    %v1050 = vld [vmem:[%s16] sm:$0xf]
    %v1051 = vld [vmem:[%s16 + $0x4] sm:$0xf]
    %v1052 = vld [vmem:[%s16 + $0x8] sm:$0xf]
    %v1053 = vld [vmem:[%s16 + $0xc] sm:$0xf]
    %v1054 = vld [vmem:[%s16 + $0x10] sm:$0xf]
    %v1055 = vld [vmem:[%s16 + $0x14] sm:$0xf]
    %v1056 = vld [vmem:[%s16 + $0x18] sm:$0xf]
    %v1057 = vld [vmem:[%s16 + $0x1c] sm:$0xf]
    %v1058 = vld [vmem:[%s16 + $0x20] sm:$0xf]
    %v1059 = vld [vmem:[%s16 + $0x24] sm:$0xf]
    %v1060 = vld [vmem:[%s16 + $0x28] sm:$0xf]
    %v1061 = vld [vmem:[%s16 + $0x2c] sm:$0xf]
    %v1062 = vld [vmem:[%s16 + $0x30] sm:$0xf]
    %v1063 = vld [vmem:[%s16 + $0x34] sm:$0xf]
    %v1064 = vld [vmem:[%s16 + $0x38] sm:$0xf]
    %v1065 = vld [vmem:[%s16 + $0x3c] sm:$0xf]
    %v1066 = vld [vmem:[%s17] sm:$0x1]
    %v1068 = vperm.slane %v1066, 0
    %v1086 = vunpack.c.l.b16 %v1050
    %v1087 = vunpack.c.l.b16 %v1051
    %v1088 = vunpack.c.l.b16 %v1052
    %v1089 = vunpack.c.l.b16 %v1053
    %v1090 = vunpack.c.l.b16 %v1054
    %v1091 = vunpack.c.l.b16 %v1055
    %v1092 = vunpack.c.l.b16 %v1056
    %v1093 = vunpack.c.l.b16 %v1057
    %v1094 = vunpack.c.l.b16 %v1058
    %v1095 = vunpack.c.l.b16 %v1059
    %v1096 = vunpack.c.l.b16 %v1060
    %v1097 = vunpack.c.l.b16 %v1061
    %v1098 = vunpack.c.l.b16 %v1062
    %v1099 = vunpack.c.l.b16 %v1063
    %v1100 = vunpack.c.l.b16 %v1064
    %v1101 = vunpack.c.l.b16 %v1065
    %v1102 = vpack.c.b16 %v1087, %v1086
    %v1103 = vpack.c.b16 %v1089, %v1088
    %v1104 = vpack.c.b16 %v1091, %v1090
    %v1105 = vpack.c.b16 %v1093, %v1092
    %v1106 = vpack.c.b16 %v1095, %v1094
    %v1107 = vpack.c.b16 %v1097, %v1096
    %v1108 = vpack.c.b16 %v1099, %v1098
    %v1109 = vpack.c.b16 %v1101, %v1100
    %1118 = vmatpush.bf16.msra.mxu0 %v1109
    %1119 = vmatpush.bf16.msra.mxu0 %v1108
    %1120 = vmatpush.bf16.msra.mxu0 %v1107
    %1121 = vmatpush.bf16.msra.mxu0 %v1106
    %1122 = vmatpush.bf16.msra.mxu0 %v1105
    %1123 = vmatpush.bf16.msra.mxu0 %v1104
    %1124 = vmatpush.bf16.msra.mxu0 %v1103
    %1125 = vmatpush.bf16.msra.mxu0 %v1102
    %1126 = vmatmul.bf16.gmra.mxu0 %v1049
    %v1127 = vpop.f32.mrf.mxu0
    %v1128 = vadd.f32 %v1068, %v1127
    %v1129 = vpop.f32.mrf.mxu0
    %v1130 = vadd.f32 %v1068, %v1129
    %1131 = vdwg.mxu0
    %v1132 = vmax.f32 %v1128, 0.0
    %v1133 = vmax.f32 %v1130, 0.0
    %1134 = vst [vmem:[#allocation26] sm:$0xff] %v1132
    %1135 = vst [vmem:[#allocation26 + $0x8] sm:$0xff] %v1133
    %1136 = vst [vmem:[#allocation27] sm:$0xff] %v839
    %1137 = vst [vmem:[#allocation27 + $0x8] sm:$0xff] %v840
    %1138 = vst [vmem:[#allocation27 + $0x10] sm:$0xff] %v841
    // Predicated region
    $region134: #{tpu_custom_call.1} parent=1 // pred_check
      _
    $region135: #{tpu_custom_call.1} parent=1 // pred_check_branch
      %1140 = sbr.rel (0) target = $region137
    $region136: #{tpu_custom_call.1} parent=1 // pred_region
      %1142 = vsyncadd [#allocation4], 0
      %s1143 = sshll.u32 [#allocation26], 4
      %s1144 = int_to_ptr.vmem [resolvable:$true] %s1143
      %s1145 = sshll.u32 %s18, 4
      %s1146 = int_to_ptr.hbm [resolvable:$true] %s1145
      %1151 = dma.vmem_to_hbm [thread:$0]  %s1144, 256, %s1146, [#allocation4], 128, 128, 8
    $region137: #{tpu_custom_call.1} parent=1 // pred_fallthru
      _
    // Predicated region
    $region138: #{tpu_custom_call.1} parent=1 // pred_check
      _
    $region139: #{tpu_custom_call.1} parent=1 // pred_check_branch
      %1153 = sbr.rel (0) target = $region141
    $region140: #{tpu_custom_call.1} parent=1 // pred_region
      %1155 = vsyncadd [#allocation28], 0
      %s1156 = sshll.u32 [#allocation27], 4
      %s1157 = int_to_ptr.vmem [resolvable:$true] %s1156
      %s1158 = sshll.u32 %s19, 4
      %s1159 = int_to_ptr.hbm [resolvable:$true] %s1158
      %1164 = dma.vmem_to_hbm [thread:$0]  %s1157, 384, %s1159, [#allocation28], 128, 128, 8
    $region141: #{tpu_custom_call.1} parent=1 // pred_fallthru
      _
    // Predicated region
    $region142: #{tpu_custom_call.1} parent=1 // pred_check
      _
    $region143: #{tpu_custom_call.1} parent=1 // pred_check_branch
      %1166 = sbr.rel (0) target = $region145
    $region144: #{tpu_custom_call.1} parent=1 // pred_region
      %1168 = dma.done [#allocation4], 256
    $region145: #{tpu_custom_call.1} parent=1 // pred_fallthru
      _
    // Predicated region
    $region146: #{tpu_custom_call.1} parent=1 // pred_check
      _
    $region147: #{tpu_custom_call.1} parent=1 // pred_check_branch
      %1170 = sbr.rel (0) target = $region149
    $region148: #{tpu_custom_call.1} parent=1 // pred_region
      %1172 = dma.done [#allocation28], 384
    $region149: #{tpu_custom_call.1} parent=1 // pred_fallthru
      _
    %1173 = vsyncpa [#allocation3], 1
    %1174 = vsyncpa [#allocation6], 1
    %1175 = vsyncpa [#allocation9], 1
    %1176 = vsyncpa [#allocation12], 1
    %1177 = vsyncpa [#allocation15], 1
    %1178 = vsyncpa [#allocation18], 1
    %1179 = vsyncpa [#allocation21], 1
    %1180 = vsyncpa [#allocation24], 1
    %1181 = vsyncpa [#allocation4], 1
    %1182 = vsyncpa [#allocation28], 1

</llo_original>
